<compile_context>
chip_gen: v7x
topology: tpu7x:2x2x1
jax: 0.10.0
libtpu: 0.0.40
codegen_flags: <defaults>
</compile_context>

<pallas_src>
import functools

import jax
import jax.numpy as jnp
from jax import lax
from jax.experimental import pallas as pl
from jax.experimental.pallas import tpu as pltpu


# ----------------------------- kernel -------------------------------------- #

def _layernorm(x, gamma, beta, eps=1e-5):
    mu = jnp.mean(x, axis=-1, keepdims=True)
    var = jnp.mean((x - mu) ** 2, axis=-1, keepdims=True)
    return (x - mu) * lax.rsqrt(var + eps) * gamma + beta


def transformer_kernel(tok_ref, pos_ref, maskb_ref,
                       wqkv_ref, bqkv_ref, wo_ref, bo_ref,
                       ln1g_ref, ln1b_ref, w1_ref, b1_ref, w2_ref, b2_ref,
                       ln2g_ref, ln2b_ref, fcw_ref, fcb_ref,
                       o_ref, *, n_layers, n_heads, inv_emb_scale, compute_dtype):
    _, S, H = tok_ref.shape            # one sequence per grid program
    hd = H // n_heads
    OP = o_ref.shape[-1]

    # embedding combine: x = tok*pos/sqrt(H) + pos  (dropout = identity)
    tok = tok_ref[...].reshape(S, H)
    pos = pos_ref[...].reshape(S, H)
    x0 = tok * pos * inv_emb_scale + pos                      # (S, H) f32
    bias = maskb_ref[...].reshape(1, 1, S)                    # additive 0 / -1e10

    def layer_body(l, x):
        # ---- fused QKV: one full-width (S,H)@(H,3H) MXU matmul ----
        qkv = jnp.dot(x.astype(compute_dtype), wqkv_ref[l],
                      preferred_element_type=jnp.float32) + bqkv_ref[l]     # (S, 3H)
        # head-major relayout (f32, minor dim untouched): (S,3H) -> (3nh, S, hd)
        qkv_h = jnp.swapaxes(qkv.reshape(S, 3 * n_heads, hd), 0, 1)
        qkv_h = qkv_h.astype(compute_dtype)
        q = qkv_h[:n_heads]                                    # (nh, S, hd), pre-scaled
        k = qkv_h[n_heads:2 * n_heads]
        v = qkv_h[2 * n_heads:]

        # ---- attention: batched over heads (single leading batch dim) ----
        e = jnp.einsum('hqd,hkd->hqk', q, k,
                       preferred_element_type=jnp.float32) + bias           # (nh, S, S)
        e = e - jnp.max(e, axis=-1, keepdims=True)
        p = jnp.exp(e)
        p = p * pl.reciprocal(jnp.sum(p, axis=-1, keepdims=True), approx=True)
        ctx = jnp.einsum('hqk,hkd->hqd', p.astype(compute_dtype), v,
                         preferred_element_type=jnp.float32)                # (nh, S, hd)

        # concat heads -> (S, H), then ONE output-projection matmul
        ctx2 = jnp.swapaxes(ctx, 0, 1).reshape(S, H)
        attn = jnp.dot(ctx2.astype(compute_dtype), wo_ref[l],
                       preferred_element_type=jnp.float32) + bo_ref[l]      # (S, H)

        y = _layernorm(x + attn, ln1g_ref[l], ln1b_ref[l])

        f = jnp.dot(y.astype(compute_dtype), w1_ref[l],
                    preferred_element_type=jnp.float32) + b1_ref[l]
        f = jnp.maximum(f, 0.0)
        f = jnp.dot(f.astype(compute_dtype), w2_ref[l],
                    preferred_element_type=jnp.float32) + b2_ref[l]
        return _layernorm(y + f, ln2g_ref[l], ln2b_ref[l])

    x = lax.fori_loop(0, n_layers, layer_body, x0)

    # lane-dense (padded to multiple of 128) final projection
    out = jnp.dot(x.astype(compute_dtype), fcw_ref[...],
                  preferred_element_type=jnp.float32) + fcb_ref[...]
    o_ref[...] = out.reshape(1, S, OP)


# ----------------------------- wrappers ------------------------------------ #

def _pack_params(layer_params, fc_w, fc_b, n_heads, compute_dtype):
    """Stack per-layer weights with a leading layer dim, pack QKV as (H, 3H),
    fold the attention scale into the q columns, pad fc_out to lane-dense width."""
    H = layer_params[0]["wq"].shape[0]
    hd = H // n_heads
    inv_att = 1.0 / (float(hd) ** 0.5)

    acc = {k: [] for k in ("wqkv", "bqkv", "wo", "bo", "ln1g", "ln1b",
                           "w1", "b1", "w2", "b2", "ln2g", "ln2b")}
    for p in layer_params:
        acc["wqkv"].append(jnp.concatenate(
            [p["wq"] * inv_att, p["wk"], p["wv"]], axis=1))                # (H, 3H)
        acc["bqkv"].append(jnp.concatenate(
            [p["bq"] * inv_att, p["bk"], p["bv"]], axis=1))                # (1, 3H)
        acc["wo"].append(p["wo"]); acc["bo"].append(p["bo"])
        acc["ln1g"].append(p["ln1_g"]); acc["ln1b"].append(p["ln1_b"])
        acc["w1"].append(p["w1"]); acc["b1"].append(p["b1"])
        acc["w2"].append(p["w2"]); acc["b2"].append(p["b2"])
        acc["ln2g"].append(p["ln2_g"]); acc["ln2b"].append(p["ln2_b"])

    st = lambda key: jnp.stack(acc[key], axis=0)
    O = fc_w.shape[1]
    OP = ((O + 127) // 128) * 128
    fc_w_pad = jnp.zeros((H, OP), jnp.float32).at[:, :O].set(fc_w)
    fc_b_pad = jnp.zeros((1, OP), jnp.float32).at[:, :O].set(fc_b)

    cd = compute_dtype
    packed = dict(
        wqkv=st("wqkv").astype(cd), bqkv=st("bqkv"),
        wo=st("wo").astype(cd), bo=st("bo"),
        ln1g=st("ln1g"), ln1b=st("ln1b"),
        w1=st("w1").astype(cd), b1=st("b1"),
        w2=st("w2").astype(cd), b2=st("b2"),
        ln2g=st("ln2g"), ln2b=st("ln2b"),
        fc_w=fc_w_pad.astype(cd), fc_b=fc_b_pad,
    )
    return packed, OP


def _resident_spec(arr):
    n = arr.ndim
    return pl.BlockSpec(arr.shape, lambda i, n=n: (0,) * n)


def transformer_forward(src, trg, src_mask, trg_mask,
                        tok_table, pos_table, layer_params, fc_w, fc_b,
                        hid_dim, n_heads,
                        compute_dtype=jnp.float32):   # bf16 on v6e/v7x for MXU speed
    # trg / trg_mask unused (same as the PyTorch forward)
    del trg, trg_mask
    B, S = src.shape
    H = hid_dim
    n_layers = len(layer_params)

    pos_ids = jnp.broadcast_to(jnp.arange(S, dtype=jnp.int32)[None, :], (B, S))
    tok_emb = tok_table[src].astype(jnp.float32)        # gathers: glue in plain JAX
    pos_emb = pos_table[pos_ids].astype(jnp.float32)
    # additive mask bias: 0 where attend, -1e10 where masked (hoisted out of kernel)
    mask_bias = jnp.where(src_mask.reshape(B, 1, S) > 0, 0.0, -1e10).astype(jnp.float32)

    packed, OP = _pack_params(layer_params, fc_w, fc_b, n_heads, compute_dtype)

    kernel = functools.partial(
        transformer_kernel, n_layers=n_layers, n_heads=n_heads,
        inv_emb_scale=1.0 / (float(H) ** 0.5), compute_dtype=compute_dtype)

    # Single fused kernel; grid over batch (>=2 programs -> pipelining + megacore /
    # v7x 2-TC sharding). All layer weights are resident full-block VMEM inputs
    # (constant index_map => no re-DMA across grid steps); footprint here is tiny.
    out = pl.pallas_call(
        kernel,
        out_shape=jax.ShapeDtypeStruct((B, S, OP), jnp.float32),
        grid=(B,),
        in_specs=[pl.BlockSpec((1, S, H), lambda i: (i, 0, 0)),
                  pl.BlockSpec((1, S, H), lambda i: (i, 0, 0)),
                  pl.BlockSpec((1, 1, S), lambda i: (i, 0, 0)),
                  _resident_spec(packed["wqkv"]), _resident_spec(packed["bqkv"]),
                  _resident_spec(packed["wo"]), _resident_spec(packed["bo"]),
                  _resident_spec(packed["ln1g"]), _resident_spec(packed["ln1b"]),
                  _resident_spec(packed["w1"]), _resident_spec(packed["b1"]),
                  _resident_spec(packed["w2"]), _resident_spec(packed["b2"]),
                  _resident_spec(packed["ln2g"]), _resident_spec(packed["ln2b"]),
                  _resident_spec(packed["fc_w"]), _resident_spec(packed["fc_b"])],
        out_specs=pl.BlockSpec((1, S, OP), lambda i: (i, 0, 0)),
        compiler_params=pltpu.CompilerParams(dimension_semantics=("parallel",)),
    )(tok_emb, pos_emb, mask_bias,
      packed["wqkv"], packed["bqkv"], packed["wo"], packed["bo"],
      packed["ln1g"], packed["ln1b"], packed["w1"], packed["b1"],
      packed["w2"], packed["b2"], packed["ln2g"], packed["ln2b"],
      packed["fc_w"], packed["fc_b"])

    return out[:, :, :fc_w.shape[1]]


# ----------------------------- pure-JAX reference --------------------------- #

def reference_forward(src, src_mask, tok_table, pos_table, layer_params,
                      fc_w, fc_b, hid_dim, n_heads):
    B, S = src.shape
    H = hid_dim
    hd = H // n_heads
    scale = float(hid_dim) ** 0.5
    pos = jnp.broadcast_to(jnp.arange(S, dtype=jnp.int32)[None, :], (B, S))
    tok_emb = tok_table[src]
    pos_emb = pos_table[pos]
    x = tok_emb * pos_emb / scale + pos_emb
    m = src_mask.reshape(B, S).astype(jnp.float32)
    for p in layer_params:
        q = (x @ p["wq"] + p["bq"][0]).reshape(B, S, n_heads, hd).transpose(0, 2, 1, 3)
        k = (x @ p["wk"] + p["bk"][0]).reshape(B, S, n_heads, hd).transpose(0, 2, 1, 3)
        v = (x @ p["wv"] + p["bv"][0]).reshape(B, S, n_heads, hd).transpose(0, 2, 1, 3)
        e = jnp.einsum("bhqd,bhkd->bhqk", q, k) / (float(hd) ** 0.5)
        e = jnp.where(m[:, None, None, :] > 0.0, e, -1e10)
        a = jax.nn.softmax(e, axis=-1)
        o = jnp.einsum("bhqk,bhkd->bhqd", a, v).transpose(0, 2, 1, 3).reshape(B, S, H)
        o = o @ p["wo"] + p["bo"][0]
        y = _layernorm(x + o, p["ln1_g"][0], p["ln1_b"][0])
        f = jnp.maximum(y @ p["w1"] + p["b1"][0], 0.0) @ p["w2"] + p["b2"][0]
        x = _layernorm(y + f, p["ln2_g"][0], p["ln2_b"][0])
    return x @ fc_w + fc_b[0]


# ----------------------------- main ----------------------------------------- #

if __name__ == "__main__":
    input_dim, output_dim = 50, 12
    hid_dim, n_layers, n_heads, pf_dim = 32, 2, 4, 64
    B, S = 2, 8

    root = jax.random.PRNGKey(0)
    _cnt = [0]

    def nxt():
        _cnt[0] += 1
        return jax.random.fold_in(root, _cnt[0])

    def nrm(shape, std=0.05):
        return jax.random.normal(nxt(), shape, jnp.float32) * std

    tok_table = nrm((input_dim, hid_dim), std=1.0)
    pos_table = nrm((1000, hid_dim), std=1.0)

    layer_params = []
    for _ in range(n_layers):
        layer_params.append(dict(
            wq=nrm((hid_dim, hid_dim)), bq=nrm((1, hid_dim)),
            wk=nrm((hid_dim, hid_dim)), bk=nrm((1, hid_dim)),
            wv=nrm((hid_dim, hid_dim)), bv=nrm((1, hid_dim)),
            wo=nrm((hid_dim, hid_dim)), bo=nrm((1, hid_dim)),
            ln1_g=jnp.ones((1, hid_dim), jnp.float32),
            ln1_b=jnp.zeros((1, hid_dim), jnp.float32),
            w1=nrm((hid_dim, pf_dim)), b1=nrm((1, pf_dim)),
            w2=nrm((pf_dim, hid_dim)), b2=nrm((1, hid_dim)),
            ln2_g=jnp.ones((1, hid_dim), jnp.float32),
            ln2_b=jnp.zeros((1, hid_dim), jnp.float32),
        ))
    fc_w = nrm((hid_dim, output_dim))
    fc_b = nrm((1, output_dim))

    src = jax.random.randint(nxt(), (B, S), 0, input_dim, dtype=jnp.int32)
    trg = jax.random.randint(nxt(), (B, S), 0, input_dim, dtype=jnp.int32)
    # src_mask in PyTorch convention [B, 1, 1, S]; second example has 2 padded tokens.
    src_mask = jnp.array([[1, 1, 1, 1, 1, 1, 1, 1],
                          [1, 1, 1, 1, 1, 1, 0, 0]], jnp.float32).reshape(B, 1, 1, S)
    trg_mask = jnp.ones((B, 1, S, S), jnp.float32)   # unused, as in the PyTorch forward

    out = transformer_forward(src, trg, src_mask, trg_mask,
                              tok_table, pos_table, layer_params, fc_w, fc_b,
                              hid_dim, n_heads, compute_dtype=jnp.float32)
    out = jax.block_until_ready(out)

    ref = reference_forward(src, src_mask, tok_table, pos_table, layer_params,
                            fc_w, fc_b, hid_dim, n_heads)
    ref = jax.block_until_ready(ref)

    assert out.shape == (B, S, output_dim)
    assert bool(jnp.all(jnp.isfinite(out)))
    # 2e-3 tolerance: approx (EUP) reciprocal in the softmax introduces ~1e-4-level
    # relative error; everything else is f32 with f32 accumulation.
    assert bool(jnp.allclose(out, ref, atol=2e-3, rtol=2e-3)), "mismatch vs reference"
    print("KERNEL_OK")
</pallas_src>

<mosaic_0001>
module attributes {stable_mosaic.version = 11 : i64} {
  func.func @transformer_kernel(%arg0: i32, %arg1: memref<1x8x32xf32, #tpu.memory_space<vmem>>, %arg2: memref<1x8x32xf32, #tpu.memory_space<vmem>>, %arg3: memref<1x1x8xf32, #tpu.memory_space<vmem>>, %arg4: memref<2x32x96xf32, #tpu.memory_space<vmem>>, %arg5: memref<2x1x96xf32, #tpu.memory_space<vmem>>, %arg6: memref<2x32x32xf32, #tpu.memory_space<vmem>>, %arg7: memref<2x1x32xf32, #tpu.memory_space<vmem>>, %arg8: memref<2x1x32xf32, #tpu.memory_space<vmem>>, %arg9: memref<2x1x32xf32, #tpu.memory_space<vmem>>, %arg10: memref<2x32x64xf32, #tpu.memory_space<vmem>>, %arg11: memref<2x1x64xf32, #tpu.memory_space<vmem>>, %arg12: memref<2x64x32xf32, #tpu.memory_space<vmem>>, %arg13: memref<2x1x32xf32, #tpu.memory_space<vmem>>, %arg14: memref<2x1x32xf32, #tpu.memory_space<vmem>>, %arg15: memref<2x1x32xf32, #tpu.memory_space<vmem>>, %arg16: memref<32x128xf32, #tpu.memory_space<vmem>>, %arg17: memref<1x128xf32, #tpu.memory_space<vmem>>, %arg18: memref<1x8x128xf32, #tpu.memory_space<vmem>>) attributes {dimension_semantics = [#tpu.dimension_semantics<parallel>], iteration_bounds = array<i64: 2>, scalar_prefetch = 0 : i64, scratch_operands = 0 : i64, tpu.core_type = #tpu.core_type<tc>, window_params = [{transform_indices = @transform_0, window_bounds = array<i64: 1, 8, 32>}, {transform_indices = @transform_1, window_bounds = array<i64: 1, 8, 32>}, {transform_indices = @transform_2, window_bounds = array<i64: 1, 1, 8>}, {pipeline_mode = #tpu.pipeline_mode<synchronous>, transform_indices = @transform_3, window_bounds = array<i64: 2, 32, 96>}, {pipeline_mode = #tpu.pipeline_mode<synchronous>, transform_indices = @transform_4, window_bounds = array<i64: 2, 1, 96>}, {pipeline_mode = #tpu.pipeline_mode<synchronous>, transform_indices = @transform_5, window_bounds = array<i64: 2, 32, 32>}, {pipeline_mode = #tpu.pipeline_mode<synchronous>, transform_indices = @transform_6, window_bounds = array<i64: 2, 1, 32>}, {pipeline_mode = #tpu.pipeline_mode<synchronous>, transform_indices = @transform_7, window_bounds = array<i64: 2, 1, 32>}, {pipeline_mode = #tpu.pipeline_mode<synchronous>, transform_indices = @transform_8, window_bounds = array<i64: 2, 1, 32>}, {pipeline_mode = #tpu.pipeline_mode<synchronous>, transform_indices = @transform_9, window_bounds = array<i64: 2, 32, 64>}, {pipeline_mode = #tpu.pipeline_mode<synchronous>, transform_indices = @transform_10, window_bounds = array<i64: 2, 1, 64>}, {pipeline_mode = #tpu.pipeline_mode<synchronous>, transform_indices = @transform_11, window_bounds = array<i64: 2, 64, 32>}, {pipeline_mode = #tpu.pipeline_mode<synchronous>, transform_indices = @transform_12, window_bounds = array<i64: 2, 1, 32>}, {pipeline_mode = #tpu.pipeline_mode<synchronous>, transform_indices = @transform_13, window_bounds = array<i64: 2, 1, 32>}, {pipeline_mode = #tpu.pipeline_mode<synchronous>, transform_indices = @transform_14, window_bounds = array<i64: 2, 1, 32>}, {pipeline_mode = #tpu.pipeline_mode<synchronous>, transform_indices = @transform_15, window_bounds = array<i64: 32, 128>}, {pipeline_mode = #tpu.pipeline_mode<synchronous>, transform_indices = @transform_16, window_bounds = array<i64: 1, 128>}, {transform_indices = @transform_17, window_bounds = array<i64: 1, 8, 128>}]} {
    %c0 = arith.constant 0 : index
    %c0_0 = arith.constant 0 : index
    %c0_1 = arith.constant 0 : index
    %0 = vector.load %arg1[%c0, %c0_0, %c0_1] : memref<1x8x32xf32, #tpu.memory_space<vmem>>, vector<1x8x32xf32>
    %1 = vector.shape_cast %0 : vector<1x8x32xf32> to vector<8x32xf32>
    %c0_2 = arith.constant 0 : index
    %c0_3 = arith.constant 0 : index
    %c0_4 = arith.constant 0 : index
    %2 = vector.load %arg2[%c0_2, %c0_3, %c0_4] : memref<1x8x32xf32, #tpu.memory_space<vmem>>, vector<1x8x32xf32>
    %3 = vector.shape_cast %2 : vector<1x8x32xf32> to vector<8x32xf32>
    %4 = arith.mulf %1, %3 : vector<8x32xf32>
    %cst = arith.constant 0.176776692 : f32
    %5 = vector.broadcast %cst : f32 to vector<8x32xf32>
    %6 = arith.mulf %4, %5 : vector<8x32xf32>
    %7 = arith.addf %6, %3 : vector<8x32xf32>
    %c0_5 = arith.constant 0 : index
    %c0_6 = arith.constant 0 : index
    %c0_7 = arith.constant 0 : index
    %8 = vector.load %arg3[%c0_5, %c0_6, %c0_7] : memref<1x1x8xf32, #tpu.memory_space<vmem>>, vector<1x1x8xf32>
    %c0_i32 = arith.constant 0 : i32
    %c2_i32 = arith.constant 2 : i32
    %9 = arith.addi %c0_i32, %c2_i32 : i32
    %c1_i32 = arith.constant 1 : i32
    %10 = scf.for %arg19 = %c0_i32 to %9 step %c1_i32 iter_args(%arg20 = %7) -> (vector<8x32xf32>)  : i32 {
      %18 = arith.index_cast %arg19 : i32 to index
      %c0_17 = arith.constant 0 : index
      %c0_18 = arith.constant 0 : index
      %19 = vector.load %arg4[%18, %c0_17, %c0_18] : memref<2x32x96xf32, #tpu.memory_space<vmem>>, vector<1x32x96xf32>
      %20 = vector.shape_cast %19 : vector<1x32x96xf32> to vector<32x96xf32>
      %cst_19 = arith.constant dense<0.000000e+00> : vector<8x96xf32>
      %21 = tpu.matmul %arg20, %20, %cst_19 {dimension_numbers = #tpu.dot_dimension_numbers<[1], [0], [0], [1], [0, 0, 1, 1], [], []>} : vector<8x32xf32>, vector<32x96xf32>, vector<8x96xf32> -> vector<8x96xf32>
      %22 = arith.index_cast %arg19 : i32 to index
      %c0_20 = arith.constant 0 : index
      %c0_21 = arith.constant 0 : index
      %23 = vector.load %arg5[%22, %c0_20, %c0_21] : memref<2x1x96xf32, #tpu.memory_space<vmem>>, vector<1x1x96xf32>
      %24 = vector.shape_cast %23 : vector<1x1x96xf32> to vector<1x96xf32>
      %25 = vector.broadcast %24 : vector<1x96xf32> to vector<8x96xf32>
      %26 = arith.addf %21, %25 : vector<8x96xf32>
      %27 = vector.shape_cast %26 : vector<8x96xf32> to vector<8x12x8xf32>
      %28 = tpu.transpose %27, [1, 0, 2] : vector<8x12x8xf32> -> vector<12x8x8xf32>
      %29 = vector.extract_strided_slice %28 {offsets = [0, 0, 0], sizes = [4, 8, 8], strides = [1, 1, 1]} : vector<12x8x8xf32> to vector<4x8x8xf32>
      %30 = vector.extract_strided_slice %28 {offsets = [4, 0, 0], sizes = [4, 8, 8], strides = [1, 1, 1]} : vector<12x8x8xf32> to vector<4x8x8xf32>
      %31 = vector.extract_strided_slice %28 {offsets = [8, 0, 0], sizes = [4, 8, 8], strides = [1, 1, 1]} : vector<12x8x8xf32> to vector<4x8x8xf32>
      "tpu.trace_start"() <{level = 10 : i32, message = "hqd,hkd->hqk"}> : () -> ()
      %cst_22 = arith.constant dense<0.000000e+00> : vector<4x8x8xf32>
      %32 = tpu.matmul %29, %30, %cst_22 {dimension_numbers = #tpu.dot_dimension_numbers<[2], [2], [1], [1], [0, 0, 0, 1, 1, 1], [0], [0]>} : vector<4x8x8xf32>, vector<4x8x8xf32>, vector<4x8x8xf32> -> vector<4x8x8xf32>
      "tpu.trace_stop"() : () -> ()
      %33 = vector.broadcast %8 : vector<1x1x8xf32> to vector<4x8x8xf32>
      %34 = arith.addf %32, %33 : vector<4x8x8xf32>
      %cst_23 = arith.constant dense<0xFF800000> : vector<4x8xf32>
      %35 = vector.multi_reduction <maximumf>, %34, %cst_23 [2] : vector<4x8x8xf32> to vector<4x8xf32>
      %36 = vector.shape_cast %35 : vector<4x8xf32> to vector<4x8x1xf32>
      %37 = vector.broadcast %36 : vector<4x8x1xf32> to vector<4x8x8xf32>
      %38 = arith.subf %34, %37 : vector<4x8x8xf32>
      %39 = math.exp %38 : vector<4x8x8xf32>
      %cst_24 = arith.constant dense<0.000000e+00> : vector<4x8xf32>
      %40 = vector.multi_reduction <add>, %39, %cst_24 [2] : vector<4x8x8xf32> to vector<4x8xf32>
      %41 = vector.shape_cast %40 : vector<4x8xf32> to vector<4x8x1xf32>
      %42 = tpu.reciprocal %41 {approx = true} : vector<4x8x1xf32> -> vector<4x8x1xf32>
      %43 = vector.broadcast %42 : vector<4x8x1xf32> to vector<4x8x8xf32>
      %44 = arith.mulf %39, %43 : vector<4x8x8xf32>
      "tpu.trace_start"() <{level = 10 : i32, message = "hqk,hkd->hqd"}> : () -> ()
      %cst_25 = arith.constant dense<0.000000e+00> : vector<4x8x8xf32>
      %45 = tpu.matmul %44, %31, %cst_25 {dimension_numbers = #tpu.dot_dimension_numbers<[2], [1], [1], [2], [0, 0, 0, 1, 1, 2], [0], [0]>} : vector<4x8x8xf32>, vector<4x8x8xf32>, vector<4x8x8xf32> -> vector<4x8x8xf32>
      "tpu.trace_stop"() : () -> ()
      %46 = tpu.transpose %45, [1, 0, 2] : vector<4x8x8xf32> -> vector<8x4x8xf32>
      %47 = vector.shape_cast %46 : vector<8x4x8xf32> to vector<8x32xf32>
      %48 = arith.index_cast %arg19 : i32 to index
      %c0_26 = arith.constant 0 : index
      %c0_27 = arith.constant 0 : index
      %49 = vector.load %arg6[%48, %c0_26, %c0_27] : memref<2x32x32xf32, #tpu.memory_space<vmem>>, vector<1x32x32xf32>
      %50 = vector.shape_cast %49 : vector<1x32x32xf32> to vector<32x32xf32>
      %cst_28 = arith.constant dense<0.000000e+00> : vector<8x32xf32>
      %51 = tpu.matmul %47, %50, %cst_28 {dimension_numbers = #tpu.dot_dimension_numbers<[1], [0], [0], [1], [0, 0, 1, 1], [], []>} : vector<8x32xf32>, vector<32x32xf32>, vector<8x32xf32> -> vector<8x32xf32>
      %52 = arith.index_cast %arg19 : i32 to index
      %c0_29 = arith.constant 0 : index
      %c0_30 = arith.constant 0 : index
      %53 = vector.load %arg7[%52, %c0_29, %c0_30] : memref<2x1x32xf32, #tpu.memory_space<vmem>>, vector<1x1x32xf32>
      %54 = vector.shape_cast %53 : vector<1x1x32xf32> to vector<1x32xf32>
      %55 = vector.broadcast %54 : vector<1x32xf32> to vector<8x32xf32>
      %56 = arith.addf %51, %55 : vector<8x32xf32>
      %57 = arith.addf %arg20, %56 : vector<8x32xf32>
      %58 = arith.index_cast %arg19 : i32 to index
      %c0_31 = arith.constant 0 : index
      %c0_32 = arith.constant 0 : index
      %59 = vector.load %arg8[%58, %c0_31, %c0_32] : memref<2x1x32xf32, #tpu.memory_space<vmem>>, vector<1x1x32xf32>
      %60 = vector.shape_cast %59 : vector<1x1x32xf32> to vector<1x32xf32>
      %61 = arith.index_cast %arg19 : i32 to index
      %c0_33 = arith.constant 0 : index
      %c0_34 = arith.constant 0 : index
      %62 = vector.load %arg9[%61, %c0_33, %c0_34] : memref<2x1x32xf32, #tpu.memory_space<vmem>>, vector<1x1x32xf32>
      %63 = vector.shape_cast %62 : vector<1x1x32xf32> to vector<1x32xf32>
      %cst_35 = arith.constant dense<0.000000e+00> : vector<8xf32>
      %64 = vector.multi_reduction <add>, %57, %cst_35 [1] : vector<8x32xf32> to vector<8xf32>
      %65 = vector.shape_cast %64 : vector<8xf32> to vector<8x1xf32>
      %cst_36 = arith.constant 3.200000e+01 : f32
      %66 = vector.broadcast %cst_36 : f32 to vector<8x1xf32>
      %67 = arith.divf %65, %66 : vector<8x1xf32>
      %68 = vector.broadcast %67 : vector<8x1xf32> to vector<8x32xf32>
      %69 = arith.subf %57, %68 : vector<8x32xf32>
      %70 = arith.mulf %69, %69 : vector<8x32xf32>
      %cst_37 = arith.constant dense<0.000000e+00> : vector<8xf32>
      %71 = vector.multi_reduction <add>, %70, %cst_37 [1] : vector<8x32xf32> to vector<8xf32>
      %72 = vector.shape_cast %71 : vector<8xf32> to vector<8x1xf32>
      %cst_38 = arith.constant 3.200000e+01 : f32
      %73 = vector.broadcast %cst_38 : f32 to vector<8x1xf32>
      %74 = arith.divf %72, %73 : vector<8x1xf32>
      %75 = vector.broadcast %67 : vector<8x1xf32> to vector<8x32xf32>
      %76 = arith.subf %57, %75 : vector<8x32xf32>
      %cst_39 = arith.constant 9.99999974E-6 : f32
      %77 = vector.broadcast %cst_39 : f32 to vector<8x1xf32>
      %78 = arith.addf %74, %77 : vector<8x1xf32>
      %79 = math.rsqrt %78 : vector<8x1xf32>
      %80 = vector.broadcast %79 : vector<8x1xf32> to vector<8x32xf32>
      %81 = arith.mulf %76, %80 : vector<8x32xf32>
      %82 = vector.broadcast %60 : vector<1x32xf32> to vector<8x32xf32>
      %83 = arith.mulf %81, %82 : vector<8x32xf32>
      %84 = vector.broadcast %63 : vector<1x32xf32> to vector<8x32xf32>
      %85 = arith.addf %83, %84 : vector<8x32xf32>
      %86 = arith.index_cast %arg19 : i32 to index
      %c0_40 = arith.constant 0 : index
      %c0_41 = arith.constant 0 : index
      %87 = vector.load %arg10[%86, %c0_40, %c0_41] : memref<2x32x64xf32, #tpu.memory_space<vmem>>, vector<1x32x64xf32>
      %88 = vector.shape_cast %87 : vector<1x32x64xf32> to vector<32x64xf32>
      %cst_42 = arith.constant dense<0.000000e+00> : vector<8x64xf32>
      %89 = tpu.matmul %85, %88, %cst_42 {dimension_numbers = #tpu.dot_dimension_numbers<[1], [0], [0], [1], [0, 0, 1, 1], [], []>} : vector<8x32xf32>, vector<32x64xf32>, vector<8x64xf32> -> vector<8x64xf32>
      %90 = arith.index_cast %arg19 : i32 to index
      %c0_43 = arith.constant 0 : index
      %c0_44 = arith.constant 0 : index
      %91 = vector.load %arg11[%90, %c0_43, %c0_44] : memref<2x1x64xf32, #tpu.memory_space<vmem>>, vector<1x1x64xf32>
      %92 = vector.shape_cast %91 : vector<1x1x64xf32> to vector<1x64xf32>
      %93 = vector.broadcast %92 : vector<1x64xf32> to vector<8x64xf32>
      %94 = arith.addf %89, %93 : vector<8x64xf32>
      %cst_45 = arith.constant 0.000000e+00 : f32
      %95 = vector.broadcast %cst_45 : f32 to vector<8x64xf32>
      %96 = arith.maximumf %94, %95 : vector<8x64xf32>
      %97 = arith.index_cast %arg19 : i32 to index
      %c0_46 = arith.constant 0 : index
      %c0_47 = arith.constant 0 : index
      %98 = vector.load %arg12[%97, %c0_46, %c0_47] : memref<2x64x32xf32, #tpu.memory_space<vmem>>, vector<1x64x32xf32>
      %99 = vector.shape_cast %98 : vector<1x64x32xf32> to vector<64x32xf32>
      %cst_48 = arith.constant dense<0.000000e+00> : vector<8x32xf32>
      %100 = tpu.matmul %96, %99, %cst_48 {dimension_numbers = #tpu.dot_dimension_numbers<[1], [0], [0], [1], [0, 0, 1, 1], [], []>} : vector<8x64xf32>, vector<64x32xf32>, vector<8x32xf32> -> vector<8x32xf32>
      %101 = arith.index_cast %arg19 : i32 to index
      %c0_49 = arith.constant 0 : index
      %c0_50 = arith.constant 0 : index
      %102 = vector.load %arg13[%101, %c0_49, %c0_50] : memref<2x1x32xf32, #tpu.memory_space<vmem>>, vector<1x1x32xf32>
      %103 = vector.shape_cast %102 : vector<1x1x32xf32> to vector<1x32xf32>
      %104 = vector.broadcast %103 : vector<1x32xf32> to vector<8x32xf32>
      %105 = arith.addf %100, %104 : vector<8x32xf32>
      %106 = arith.addf %85, %105 : vector<8x32xf32>
      %107 = arith.index_cast %arg19 : i32 to index
      %c0_51 = arith.constant 0 : index
      %c0_52 = arith.constant 0 : index
      %108 = vector.load %arg14[%107, %c0_51, %c0_52] : memref<2x1x32xf32, #tpu.memory_space<vmem>>, vector<1x1x32xf32>
      %109 = vector.shape_cast %108 : vector<1x1x32xf32> to vector<1x32xf32>
      %110 = arith.index_cast %arg19 : i32 to index
      %c0_53 = arith.constant 0 : index
      %c0_54 = arith.constant 0 : index
      %111 = vector.load %arg15[%110, %c0_53, %c0_54] : memref<2x1x32xf32, #tpu.memory_space<vmem>>, vector<1x1x32xf32>
      %112 = vector.shape_cast %111 : vector<1x1x32xf32> to vector<1x32xf32>
      %cst_55 = arith.constant dense<0.000000e+00> : vector<8xf32>
      %113 = vector.multi_reduction <add>, %106, %cst_55 [1] : vector<8x32xf32> to vector<8xf32>
      %114 = vector.shape_cast %113 : vector<8xf32> to vector<8x1xf32>
      %cst_56 = arith.constant 3.200000e+01 : f32
      %115 = vector.broadcast %cst_56 : f32 to vector<8x1xf32>
      %116 = arith.divf %114, %115 : vector<8x1xf32>
      %117 = vector.broadcast %116 : vector<8x1xf32> to vector<8x32xf32>
      %118 = arith.subf %106, %117 : vector<8x32xf32>
      %119 = arith.mulf %118, %118 : vector<8x32xf32>
      %cst_57 = arith.constant dense<0.000000e+00> : vector<8xf32>
      %120 = vector.multi_reduction <add>, %119, %cst_57 [1] : vector<8x32xf32> to vector<8xf32>
      %121 = vector.shape_cast %120 : vector<8xf32> to vector<8x1xf32>
      %cst_58 = arith.constant 3.200000e+01 : f32
      %122 = vector.broadcast %cst_58 : f32 to vector<8x1xf32>
      %123 = arith.divf %121, %122 : vector<8x1xf32>
      %124 = vector.broadcast %116 : vector<8x1xf32> to vector<8x32xf32>
      %125 = arith.subf %106, %124 : vector<8x32xf32>
      %cst_59 = arith.constant 9.99999974E-6 : f32
      %126 = vector.broadcast %cst_59 : f32 to vector<8x1xf32>
      %127 = arith.addf %123, %126 : vector<8x1xf32>
      %128 = math.rsqrt %127 : vector<8x1xf32>
      %129 = vector.broadcast %128 : vector<8x1xf32> to vector<8x32xf32>
      %130 = arith.mulf %125, %129 : vector<8x32xf32>
      %131 = vector.broadcast %109 : vector<1x32xf32> to vector<8x32xf32>
      %132 = arith.mulf %130, %131 : vector<8x32xf32>
      %133 = vector.broadcast %112 : vector<1x32xf32> to vector<8x32xf32>
      %134 = arith.addf %132, %133 : vector<8x32xf32>
      scf.yield %134 : vector<8x32xf32>
    }
    %c2_i32_8 = arith.constant 2 : i32
    %c0_9 = arith.constant 0 : index
    %c0_10 = arith.constant 0 : index
    %11 = vector.load %arg16[%c0_9, %c0_10] : memref<32x128xf32, #tpu.memory_space<vmem>>, vector<32x128xf32>
    %cst_11 = arith.constant dense<0.000000e+00> : vector<8x128xf32>
    %12 = tpu.matmul %10, %11, %cst_11 {dimension_numbers = #tpu.dot_dimension_numbers<[1], [0], [0], [1], [0, 0, 1, 1], [], []>} : vector<8x32xf32>, vector<32x128xf32>, vector<8x128xf32> -> vector<8x128xf32>
    %c0_12 = arith.constant 0 : index
    %c0_13 = arith.constant 0 : index
    %13 = vector.load %arg17[%c0_12, %c0_13] : memref<1x128xf32, #tpu.memory_space<vmem>>, vector<1x128xf32>
    %14 = vector.broadcast %13 : vector<1x128xf32> to vector<8x128xf32>
    %15 = arith.addf %12, %14 : vector<8x128xf32>
    %16 = vector.shape_cast %15 : vector<8x128xf32> to vector<1x8x128xf32>
    %c0_14 = arith.constant 0 : index
    %c0_15 = arith.constant 0 : index
    %c0_16 = arith.constant 0 : index
    %17 = vector.load %arg18[%c0_14, %c0_15, %c0_16] : memref<1x8x128xf32, #tpu.memory_space<vmem>>, vector<1x8x128xf32>
    tpu.vector_store %arg18[%c0_14, %c0_15, %c0_16], %16 {strides = array<i32>} : memref<1x8x128xf32, #tpu.memory_space<vmem>>, vector<1x8x128xf32>,
    return
  }
  func.func @transform_0(%arg0: i32) -> (i32, i32, i32) {
    %c0_i32 = arith.constant 0 : i32
    %c0_i32_0 = arith.constant 0 : i32
    %c0_i32_1 = arith.constant 0 : i32
    return %arg0, %c0_i32, %c0_i32_0 : i32, i32, i32
  }
  func.func @transform_1(%arg0: i32) -> (i32, i32, i32) {
    %c0_i32 = arith.constant 0 : i32
    %c0_i32_0 = arith.constant 0 : i32
    %c0_i32_1 = arith.constant 0 : i32
    return %arg0, %c0_i32, %c0_i32_0 : i32, i32, i32
  }
  func.func @transform_2(%arg0: i32) -> (i32, i32, i32) {
    %c0_i32 = arith.constant 0 : i32
    %c0_i32_0 = arith.constant 0 : i32
    %c0_i32_1 = arith.constant 0 : i32
    return %arg0, %c0_i32, %c0_i32_0 : i32, i32, i32
  }
  func.func @transform_3(%arg0: i32) -> (i32, i32, i32) {
    %c0_i32 = arith.constant 0 : i32
    %c0_i32_0 = arith.constant 0 : i32
    %c0_i32_1 = arith.constant 0 : i32
    %c0_i32_2 = arith.constant 0 : i32
    return %c0_i32, %c0_i32_0, %c0_i32_1 : i32, i32, i32
  }
  func.func @transform_4(%arg0: i32) -> (i32, i32, i32) {
    %c0_i32 = arith.constant 0 : i32
    %c0_i32_0 = arith.constant 0 : i32
    %c0_i32_1 = arith.constant 0 : i32
    %c0_i32_2 = arith.constant 0 : i32
    return %c0_i32, %c0_i32_0, %c0_i32_1 : i32, i32, i32
  }
  func.func @transform_5(%arg0: i32) -> (i32, i32, i32) {
    %c0_i32 = arith.constant 0 : i32
    %c0_i32_0 = arith.constant 0 : i32
    %c0_i32_1 = arith.constant 0 : i32
    %c0_i32_2 = arith.constant 0 : i32
    return %c0_i32, %c0_i32_0, %c0_i32_1 : i32, i32, i32
  }
  func.func @transform_6(%arg0: i32) -> (i32, i32, i32) {
    %c0_i32 = arith.constant 0 : i32
    %c0_i32_0 = arith.constant 0 : i32
    %c0_i32_1 = arith.constant 0 : i32
    %c0_i32_2 = arith.constant 0 : i32
    return %c0_i32, %c0_i32_0, %c0_i32_1 : i32, i32, i32
  }
  func.func @transform_7(%arg0: i32) -> (i32, i32, i32) {
    %c0_i32 = arith.constant 0 : i32
    %c0_i32_0 = arith.constant 0 : i32
    %c0_i32_1 = arith.constant 0 : i32
    %c0_i32_2 = arith.constant 0 : i32
    return %c0_i32, %c0_i32_0, %c0_i32_1 : i32, i32, i32
  }
  func.func @transform_8(%arg0: i32) -> (i32, i32, i32) {
    %c0_i32 = arith.constant 0 : i32
    %c0_i32_0 = arith.constant 0 : i32
    %c0_i32_1 = arith.constant 0 : i32
    %c0_i32_2 = arith.constant 0 : i32
    return %c0_i32, %c0_i32_0, %c0_i32_1 : i32, i32, i32
  }
  func.func @transform_9(%arg0: i32) -> (i32, i32, i32) {
    %c0_i32 = arith.constant 0 : i32
    %c0_i32_0 = arith.constant 0 : i32
    %c0_i32_1 = arith.constant 0 : i32
    %c0_i32_2 = arith.constant 0 : i32
    return %c0_i32, %c0_i32_0, %c0_i32_1 : i32, i32, i32
  }
  func.func @transform_10(%arg0: i32) -> (i32, i32, i32) {
    %c0_i32 = arith.constant 0 : i32
    %c0_i32_0 = arith.constant 0 : i32
    %c0_i32_1 = arith.constant 0 : i32
    %c0_i32_2 = arith.constant 0 : i32
    return %c0_i32, %c0_i32_0, %c0_i32_1 : i32, i32, i32
  }
  func.func @transform_11(%arg0: i32) -> (i32, i32, i32) {
    %c0_i32 = arith.constant 0 : i32
    %c0_i32_0 = arith.constant 0 : i32
    %c0_i32_1 = arith.constant 0 : i32
    %c0_i32_2 = arith.constant 0 : i32
    return %c0_i32, %c0_i32_0, %c0_i32_1 : i32, i32, i32
  }
  func.func @transform_12(%arg0: i32) -> (i32, i32, i32) {
    %c0_i32 = arith.constant 0 : i32
    %c0_i32_0 = arith.constant 0 : i32
    %c0_i32_1 = arith.constant 0 : i32
    %c0_i32_2 = arith.constant 0 : i32
    return %c0_i32, %c0_i32_0, %c0_i32_1 : i32, i32, i32
  }
  func.func @transform_13(%arg0: i32) -> (i32, i32, i32) {
    %c0_i32 = arith.constant 0 : i32
    %c0_i32_0 = arith.constant 0 : i32
    %c0_i32_1 = arith.constant 0 : i32
    %c0_i32_2 = arith.constant 0 : i32
    return %c0_i32, %c0_i32_0, %c0_i32_1 : i32, i32, i32
  }
  func.func @transform_14(%arg0: i32) -> (i32, i32, i32) {
    %c0_i32 = arith.constant 0 : i32
    %c0_i32_0 = arith.constant 0 : i32
    %c0_i32_1 = arith.constant 0 : i32
    %c0_i32_2 = arith.constant 0 : i32
    return %c0_i32, %c0_i32_0, %c0_i32_1 : i32, i32, i32
  }
  func.func @transform_15(%arg0: i32) -> (i32, i32) {
    %c0_i32 = arith.constant 0 : i32
    %c0_i32_0 = arith.constant 0 : i32
    %c0_i32_1 = arith.constant 0 : i32
    return %c0_i32, %c0_i32_0 : i32, i32
  }
  func.func @transform_16(%arg0: i32) -> (i32, i32) {
    %c0_i32 = arith.constant 0 : i32
    %c0_i32_0 = arith.constant 0 : i32
    %c0_i32_1 = arith.constant 0 : i32
    return %c0_i32, %c0_i32_0 : i32, i32
  }
  func.func @transform_17(%arg0: i32) -> (i32, i32, i32) {
    %c0_i32 = arith.constant 0 : i32
    %c0_i32_0 = arith.constant 0 : i32
    %c0_i32_1 = arith.constant 0 : i32
    return %arg0, %c0_i32, %c0_i32_0 : i32, i32, i32
  }
}

</mosaic_0001>

<llo_original>
// kernel: tpu_custom_call.1
$region0: #{tpu_custom_call.1}
  #allocation0 [shape = 'u32[]', space=smem, size = 0x4, offset = 0x4, fixed_abs, tag = 'smem constant byte address 0x4 - core index']
  #allocation1 [shape = 'u32[144,128]{1,0:T(1,128)}', space=vmem, size = 0x12000, scoped, tag = 'internal scratch']
  %s0 = inlined_call_operand.hbm [shape: f32[2,8,32], index: 0, kind: input, shape index: {}]
  %s1 = inlined_call_operand.hbm [shape: f32[2,8,32], index: 1, kind: input, shape index: {}]
  %s2 = inlined_call_operand.vmem [shape: f32[2,1,8], index: 2, kind: input, shape index: {}]
  %s3 = inlined_call_operand.vmem [shape: f32[2,32,96], index: 3, kind: input, shape index: {}]
  %s4 = inlined_call_operand.hbm [shape: f32[2,1,96], index: 4, kind: input, shape index: {}]
  %s5 = inlined_call_operand.vmem [shape: f32[2,32,32], index: 5, kind: input, shape index: {}]
  %s6 = inlined_call_operand.hbm [shape: f32[2,1,32], index: 6, kind: input, shape index: {}]
  %s7 = inlined_call_operand.hbm [shape: f32[2,1,32], index: 7, kind: input, shape index: {}]
  %s8 = inlined_call_operand.hbm [shape: f32[2,1,32], index: 8, kind: input, shape index: {}]
  %s9 = inlined_call_operand.vmem [shape: f32[2,32,64], index: 9, kind: input, shape index: {}]
  %s10 = inlined_call_operand.vmem [shape: f32[2,1,64], index: 10, kind: input, shape index: {}]
  %s11 = inlined_call_operand.vmem [shape: f32[2,64,32], index: 11, kind: input, shape index: {}]
  %s12 = inlined_call_operand.vmem [shape: f32[2,1,32], index: 12, kind: input, shape index: {}]
  %s13 = inlined_call_operand.vmem [shape: f32[2,1,32], index: 13, kind: input, shape index: {}]
  %s14 = inlined_call_operand.vmem [shape: f32[2,1,32], index: 14, kind: input, shape index: {}]
  %s15 = inlined_call_operand.vmem [shape: f32[32,128], index: 15, kind: input, shape index: {}]
  %s16 = inlined_call_operand.vmem [shape: f32[1,128], index: 16, kind: input, shape index: {}]
  %s17 = inlined_call_operand.hbm [shape: f32[2,8,128], index: 17, kind: output, shape index: {}]
  %s18 = sld [smem:[#allocation0]]
  $region132: #{tpu_custom_call.1} parent=0
    _
  %s20 = ssub.s32 1, %s18
  %s21 = scalar_select 0, %s20, %s18
  $region1: #{tpu_custom_call.1} parent=0
    #allocation2 [shape = 'u8[8192]{0}', space=vmem, size = 0x2000, scoped, tag = 'input window, operand 0']
    #allocation3 [shape = 's32[2]{0}', space=sflag, size = 0x8, scoped, tag = 'scoped memory for tpu_custom_call.1']
    #allocation4 [shape = 's32[2]{0}', space=sflag, size = 0x8, scoped, tag = 'scoped memory for tpu_custom_call.1']
    #allocation5 [shape = 'u8[8192]{0}', space=vmem, size = 0x2000, scoped, tag = 'input window, operand 1']
    #allocation6 [shape = 's32[2]{0}', space=sflag, size = 0x8, scoped, tag = 'scoped memory for tpu_custom_call.1']
    #allocation7 [shape = 'u8[1024]{0}', space=vmem, size = 0x400, scoped, tag = 'input window, operand 4, single buffered']
    #allocation8 [shape = 'u8[1024]{0}', space=vmem, size = 0x400, scoped, tag = 'input window, operand 6, single buffered']
    #allocation9 [shape = 's32[1]{0}', space=sflag, size = 0x4, scoped, tag = 'scoped memory for tpu_custom_call.1']
    #allocation10 [shape = 'u8[1024]{0}', space=vmem, size = 0x400, scoped, tag = 'input window, operand 7, single buffered']
    #allocation11 [shape = 'u8[1024]{0}', space=vmem, size = 0x400, scoped, tag = 'input window, operand 8, single buffered']
    #allocation12 [shape = 's32[1]{0}', space=sflag, size = 0x4, scoped, tag = 'scoped memory for tpu_custom_call.1']
    #allocation13 [shape = 'u8[8192]{0}', space=vmem, size = 0x2000, scoped, tag = 'output window, operand 0']
    %22 = vsyncpa [#allocation3], 0
    %s23 = scalar_lea.sflag [#allocation3], 1
    %24 = vsyncpa %s23, 0
    %25 = vsyncpa [#allocation6], 0
    %s26 = scalar_lea.sflag [#allocation6], 1
    %27 = vsyncpa %s26, 0
    %28 = vsyncpa [#allocation9], 0
    %29 = vsyncpa [#allocation12], 0
    %30 = vsyncpa [#allocation4], 0
    %s31 = scalar_lea.sflag [#allocation4], 1
    %32 = vsyncpa %s31, 0
    loop: start=0, step=1, limit=4
    $region2: #{tpu_custom_call.1} parent=1 // loop_pre_header
      _
    $region3: #{tpu_custom_call.1} parent=1 // loop_header
      %s34 = sphi 0, %s38
      %p35 = scmp.ge.s32.totalorder %s34, 4
      %s44 = sphi 0, %s46
      %s47 = sphi 0, %s44
      %s48 = sphi 0, %s47
      %s64 = sphi 0, %s48
      %s70 = sphi 0, %s72
      %s73 = sphi 0, %s70
      %s74 = sphi 0, %s73
      %s90 = sphi 0, %s74
      %s96 = sphi 0, %s98
      %s99 = sphi 0, %s96
      %s100 = sphi 0, %s99
      %s116 = sphi 0, %s100
      %s120 = sphi 0, %s120
      %s122 = sphi 0, %s120
      %s123 = sphi 0, %s122
      %s137 = sphi 0, %s123
      %s141 = sphi 0, %s141
      %s143 = sphi 0, %s141
      %s144 = sphi 0, %s143
      %s158 = sphi 0, %s144
      %s162 = sphi 0, %s162
      %s164 = sphi 0, %s162
      %s165 = sphi 0, %s164
      %s179 = sphi 0, %s165
      %s183 = sphi 0, %s183
      %s185 = sphi 0, %s183
      %s186 = sphi 0, %s185
      %s200 = sphi 0, %s186
      %s204 = sphi 0, %s204
      %s206 = sphi 0, %s204
      %s207 = sphi 0, %s206
      %s221 = sphi 0, %s207
      %s225 = sphi 0, %s225
      %s227 = sphi 0, %s225
      %s228 = sphi 0, %s227
      %s242 = sphi 0, %s228
      %s246 = sphi 0, %s246
      %s248 = sphi 0, %s246
      %s249 = sphi 0, %s248
      %s263 = sphi 0, %s249
      %s267 = sphi 0, %s267
      %s269 = sphi 0, %s267
      %s270 = sphi 0, %s269
      %s284 = sphi 0, %s270
      %s288 = sphi 0, %s288
      %s290 = sphi 0, %s288
      %s291 = sphi 0, %s290
      %s305 = sphi 0, %s291
      %s309 = sphi 0, %s309
      %s311 = sphi 0, %s309
      %s312 = sphi 0, %s311
      %s326 = sphi 0, %s312
      %s330 = sphi 0, %s330
      %s332 = sphi 0, %s330
      %s333 = sphi 0, %s332
      %s347 = sphi 0, %s333
      %s351 = sphi 0, %s351
      %s353 = sphi 0, %s351
      %s354 = sphi 0, %s353
      %s368 = sphi 0, %s354
      %s372 = sphi 0, %s372
      %s374 = sphi 0, %s372
      %s375 = sphi 0, %s374
      %s389 = sphi 0, %s375
      %s393 = sphi 0, %s393
      %s395 = sphi 0, %s393
      %s396 = sphi 0, %s395
      %s410 = sphi 0, %s396
      %s416 = sphi 0, %s418
      %s419 = sphi 0, %s416
      %s420 = sphi 0, %s419
      %s436 = sphi 0, %s420
    $region4: #{tpu_custom_call.1} parent=1 // loop_header_branch
      %37 = sbr.rel (%p35) target = $region8
    $region5: #{tpu_custom_call.1} parent=1 // loop_body
      %s39 = ssub.s32 %s34, 1
      %s40 = ssub.s32 %s34, 2
      %s41 = sadd.s32 %s34, 1
      %s42 = ssub.s32 %s34, %s41
      %p43 = scmp.eq.s32.totalorder %s42, 0
      %s45 = sadd.s32 %s44, 1
      %s46 = scalar_select %p43, %s44, %s45
      %p49 = pneg %p43
      %p50 = scmp.eq.s32.totalorder %s34, 1
      %p51 = por %p49, %p50
      %p52 = scmp.ne.s32.totalorder %s44, %s47
      %p53 = scmp.eq.s32.totalorder %s34, 0
      %p54 = por %p52, %p53
      %p55 = scmp.ne.s32.totalorder %s44, %s47
      %p56 = scmp.eq.s32.totalorder %s39, 1
      %p57 = por %p55, %p56
      %p58 = scmp.ne.s32.totalorder %s47, %s48
      %p59 = scmp.eq.s32.totalorder %s39, 0
      %p60 = por %p58, %p59
      %p61 = scmp.ne.s32.totalorder %s47, %s48
      %p62 = scmp.eq.s32.totalorder %s40, 1
      %p63 = por %p61, %p62
      %p65 = scmp.ne.s32.totalorder %s48, %s64
      %p66 = scmp.eq.s32.totalorder %s40, 0
      %p67 = por %p65, %p66
      %s68 = ssub.s32 %s34, %s41
      %p69 = scmp.eq.s32.totalorder %s68, 0
      %s71 = sadd.s32 %s70, 1
      %s72 = scalar_select %p69, %s70, %s71
      %p75 = pneg %p69
      %p76 = scmp.eq.s32.totalorder %s34, 1
      %p77 = por %p75, %p76
      %p78 = scmp.ne.s32.totalorder %s70, %s73
      %p79 = scmp.eq.s32.totalorder %s34, 0
      %p80 = por %p78, %p79
      %p81 = scmp.ne.s32.totalorder %s70, %s73
      %p82 = scmp.eq.s32.totalorder %s39, 1
      %p83 = por %p81, %p82
      %p84 = scmp.ne.s32.totalorder %s73, %s74
      %p85 = scmp.eq.s32.totalorder %s39, 0
      %p86 = por %p84, %p85
      %p87 = scmp.ne.s32.totalorder %s73, %s74
      %p88 = scmp.eq.s32.totalorder %s40, 1
      %p89 = por %p87, %p88
      %p91 = scmp.ne.s32.totalorder %s74, %s90
      %p92 = scmp.eq.s32.totalorder %s40, 0
      %p93 = por %p91, %p92
      %s94 = ssub.s32 %s34, %s41
      %p95 = scmp.eq.s32.totalorder %s94, 0
      %s97 = sadd.s32 %s96, 1
      %s98 = scalar_select %p95, %s96, %s97
      %p101 = pneg %p95
      %p102 = scmp.eq.s32.totalorder %s34, 1
      %p103 = por %p101, %p102
      %p104 = scmp.ne.s32.totalorder %s96, %s99
      %p105 = scmp.eq.s32.totalorder %s34, 0
      %p106 = por %p104, %p105
      %p107 = scmp.ne.s32.totalorder %s96, %s99
      %p108 = scmp.eq.s32.totalorder %s39, 1
      %p109 = por %p107, %p108
      %p110 = scmp.ne.s32.totalorder %s99, %s100
      %p111 = scmp.eq.s32.totalorder %s39, 0
      %p112 = por %p110, %p111
      %p113 = scmp.ne.s32.totalorder %s99, %s100
      %p114 = scmp.eq.s32.totalorder %s40, 1
      %p115 = por %p113, %p114
      %p117 = scmp.ne.s32.totalorder %s100, %s116
      %p118 = scmp.eq.s32.totalorder %s40, 0
      %p119 = por %p117, %p118
      %s121 = sadd.s32 %s120, 1
      %p124 = scmp.eq.s32.totalorder %s34, 1
      %p125 = scmp.ne.s32.totalorder %s120, %s122
      %p126 = scmp.eq.s32.totalorder %s34, 0
      %p127 = por %p125, %p126
      %p128 = scmp.ne.s32.totalorder %s120, %s122
      %p129 = scmp.eq.s32.totalorder %s39, 1
      %p130 = por %p128, %p129
      %p131 = scmp.ne.s32.totalorder %s122, %s123
      %p132 = scmp.eq.s32.totalorder %s39, 0
      %p133 = por %p131, %p132
      %p134 = scmp.ne.s32.totalorder %s122, %s123
      %p135 = scmp.eq.s32.totalorder %s40, 1
      %p136 = por %p134, %p135
      %p138 = scmp.ne.s32.totalorder %s123, %s137
      %p139 = scmp.eq.s32.totalorder %s40, 0
      %p140 = por %p138, %p139
      %s142 = sadd.s32 %s141, 1
      %p145 = scmp.eq.s32.totalorder %s34, 1
      %p146 = scmp.ne.s32.totalorder %s141, %s143
      %p147 = scmp.eq.s32.totalorder %s34, 0
      %p148 = por %p146, %p147
      %p149 = scmp.ne.s32.totalorder %s141, %s143
      %p150 = scmp.eq.s32.totalorder %s39, 1
      %p151 = por %p149, %p150
      %p152 = scmp.ne.s32.totalorder %s143, %s144
      %p153 = scmp.eq.s32.totalorder %s39, 0
      %p154 = por %p152, %p153
      %p155 = scmp.ne.s32.totalorder %s143, %s144
      %p156 = scmp.eq.s32.totalorder %s40, 1
      %p157 = por %p155, %p156
      %p159 = scmp.ne.s32.totalorder %s144, %s158
      %p160 = scmp.eq.s32.totalorder %s40, 0
      %p161 = por %p159, %p160
      %s163 = sadd.s32 %s162, 1
      %p166 = scmp.eq.s32.totalorder %s34, 1
      %p167 = scmp.ne.s32.totalorder %s162, %s164
      %p168 = scmp.eq.s32.totalorder %s34, 0
      %p169 = por %p167, %p168
      %p170 = scmp.ne.s32.totalorder %s162, %s164
      %p171 = scmp.eq.s32.totalorder %s39, 1
      %p172 = por %p170, %p171
      %p173 = scmp.ne.s32.totalorder %s164, %s165
      %p174 = scmp.eq.s32.totalorder %s39, 0
      %p175 = por %p173, %p174
      %p176 = scmp.ne.s32.totalorder %s164, %s165
      %p177 = scmp.eq.s32.totalorder %s40, 1
      %p178 = por %p176, %p177
      %p180 = scmp.ne.s32.totalorder %s165, %s179
      %p181 = scmp.eq.s32.totalorder %s40, 0
      %p182 = por %p180, %p181
      %s184 = sadd.s32 %s183, 1
      %p187 = scmp.eq.s32.totalorder %s34, 1
      %p188 = scmp.ne.s32.totalorder %s183, %s185
      %p189 = scmp.eq.s32.totalorder %s34, 0
      %p190 = por %p188, %p189
      %p191 = scmp.ne.s32.totalorder %s183, %s185
      %p192 = scmp.eq.s32.totalorder %s39, 1
      %p193 = por %p191, %p192
      %p194 = scmp.ne.s32.totalorder %s185, %s186
      %p195 = scmp.eq.s32.totalorder %s39, 0
      %p196 = por %p194, %p195
      %p197 = scmp.ne.s32.totalorder %s185, %s186
      %p198 = scmp.eq.s32.totalorder %s40, 1
      %p199 = por %p197, %p198
      %p201 = scmp.ne.s32.totalorder %s186, %s200
      %p202 = scmp.eq.s32.totalorder %s40, 0
      %p203 = por %p201, %p202
      %s205 = sadd.s32 %s204, 1
      %p208 = scmp.eq.s32.totalorder %s34, 1
      %p209 = scmp.ne.s32.totalorder %s204, %s206
      %p210 = scmp.eq.s32.totalorder %s34, 0
      %p211 = por %p209, %p210
      %p212 = scmp.ne.s32.totalorder %s204, %s206
      %p213 = scmp.eq.s32.totalorder %s39, 1
      %p214 = por %p212, %p213
      %p215 = scmp.ne.s32.totalorder %s206, %s207
      %p216 = scmp.eq.s32.totalorder %s39, 0
      %p217 = por %p215, %p216
      %p218 = scmp.ne.s32.totalorder %s206, %s207
      %p219 = scmp.eq.s32.totalorder %s40, 1
      %p220 = por %p218, %p219
      %p222 = scmp.ne.s32.totalorder %s207, %s221
      %p223 = scmp.eq.s32.totalorder %s40, 0
      %p224 = por %p222, %p223
      %s226 = sadd.s32 %s225, 1
      %p229 = scmp.eq.s32.totalorder %s34, 1
      %p230 = scmp.ne.s32.totalorder %s225, %s227
      %p231 = scmp.eq.s32.totalorder %s34, 0
      %p232 = por %p230, %p231
      %p233 = scmp.ne.s32.totalorder %s225, %s227
      %p234 = scmp.eq.s32.totalorder %s39, 1
      %p235 = por %p233, %p234
      %p236 = scmp.ne.s32.totalorder %s227, %s228
      %p237 = scmp.eq.s32.totalorder %s39, 0
      %p238 = por %p236, %p237
      %p239 = scmp.ne.s32.totalorder %s227, %s228
      %p240 = scmp.eq.s32.totalorder %s40, 1
      %p241 = por %p239, %p240
      %p243 = scmp.ne.s32.totalorder %s228, %s242
      %p244 = scmp.eq.s32.totalorder %s40, 0
      %p245 = por %p243, %p244
      %s247 = sadd.s32 %s246, 1
      %p250 = scmp.eq.s32.totalorder %s34, 1
      %p251 = scmp.ne.s32.totalorder %s246, %s248
      %p252 = scmp.eq.s32.totalorder %s34, 0
      %p253 = por %p251, %p252
      %p254 = scmp.ne.s32.totalorder %s246, %s248
      %p255 = scmp.eq.s32.totalorder %s39, 1
      %p256 = por %p254, %p255
      %p257 = scmp.ne.s32.totalorder %s248, %s249
      %p258 = scmp.eq.s32.totalorder %s39, 0
      %p259 = por %p257, %p258
      %p260 = scmp.ne.s32.totalorder %s248, %s249
      %p261 = scmp.eq.s32.totalorder %s40, 1
      %p262 = por %p260, %p261
      %p264 = scmp.ne.s32.totalorder %s249, %s263
      %p265 = scmp.eq.s32.totalorder %s40, 0
      %p266 = por %p264, %p265
      %s268 = sadd.s32 %s267, 1
      %p271 = scmp.eq.s32.totalorder %s34, 1
      %p272 = scmp.ne.s32.totalorder %s267, %s269
      %p273 = scmp.eq.s32.totalorder %s34, 0
      %p274 = por %p272, %p273
      %p275 = scmp.ne.s32.totalorder %s267, %s269
      %p276 = scmp.eq.s32.totalorder %s39, 1
      %p277 = por %p275, %p276
      %p278 = scmp.ne.s32.totalorder %s269, %s270
      %p279 = scmp.eq.s32.totalorder %s39, 0
      %p280 = por %p278, %p279
      %p281 = scmp.ne.s32.totalorder %s269, %s270
      %p282 = scmp.eq.s32.totalorder %s40, 1
      %p283 = por %p281, %p282
      %p285 = scmp.ne.s32.totalorder %s270, %s284
      %p286 = scmp.eq.s32.totalorder %s40, 0
      %p287 = por %p285, %p286
      %s289 = sadd.s32 %s288, 1
      %p292 = scmp.eq.s32.totalorder %s34, 1
      %p293 = scmp.ne.s32.totalorder %s288, %s290
      %p294 = scmp.eq.s32.totalorder %s34, 0
      %p295 = por %p293, %p294
      %p296 = scmp.ne.s32.totalorder %s288, %s290
      %p297 = scmp.eq.s32.totalorder %s39, 1
      %p298 = por %p296, %p297
      %p299 = scmp.ne.s32.totalorder %s290, %s291
      %p300 = scmp.eq.s32.totalorder %s39, 0
      %p301 = por %p299, %p300
      %p302 = scmp.ne.s32.totalorder %s290, %s291
      %p303 = scmp.eq.s32.totalorder %s40, 1
      %p304 = por %p302, %p303
      %p306 = scmp.ne.s32.totalorder %s291, %s305
      %p307 = scmp.eq.s32.totalorder %s40, 0
      %p308 = por %p306, %p307
      %s310 = sadd.s32 %s309, 1
      %p313 = scmp.eq.s32.totalorder %s34, 1
      %p314 = scmp.ne.s32.totalorder %s309, %s311
      %p315 = scmp.eq.s32.totalorder %s34, 0
      %p316 = por %p314, %p315
      %p317 = scmp.ne.s32.totalorder %s309, %s311
      %p318 = scmp.eq.s32.totalorder %s39, 1
      %p319 = por %p317, %p318
      %p320 = scmp.ne.s32.totalorder %s311, %s312
      %p321 = scmp.eq.s32.totalorder %s39, 0
      %p322 = por %p320, %p321
      %p323 = scmp.ne.s32.totalorder %s311, %s312
      %p324 = scmp.eq.s32.totalorder %s40, 1
      %p325 = por %p323, %p324
      %p327 = scmp.ne.s32.totalorder %s312, %s326
      %p328 = scmp.eq.s32.totalorder %s40, 0
      %p329 = por %p327, %p328
      %s331 = sadd.s32 %s330, 1
      %p334 = scmp.eq.s32.totalorder %s34, 1
      %p335 = scmp.ne.s32.totalorder %s330, %s332
      %p336 = scmp.eq.s32.totalorder %s34, 0
      %p337 = por %p335, %p336
      %p338 = scmp.ne.s32.totalorder %s330, %s332
      %p339 = scmp.eq.s32.totalorder %s39, 1
      %p340 = por %p338, %p339
      %p341 = scmp.ne.s32.totalorder %s332, %s333
      %p342 = scmp.eq.s32.totalorder %s39, 0
      %p343 = por %p341, %p342
      %p344 = scmp.ne.s32.totalorder %s332, %s333
      %p345 = scmp.eq.s32.totalorder %s40, 1
      %p346 = por %p344, %p345
      %p348 = scmp.ne.s32.totalorder %s333, %s347
      %p349 = scmp.eq.s32.totalorder %s40, 0
      %p350 = por %p348, %p349
      %s352 = sadd.s32 %s351, 1
      %p355 = scmp.eq.s32.totalorder %s34, 1
      %p356 = scmp.ne.s32.totalorder %s351, %s353
      %p357 = scmp.eq.s32.totalorder %s34, 0
      %p358 = por %p356, %p357
      %p359 = scmp.ne.s32.totalorder %s351, %s353
      %p360 = scmp.eq.s32.totalorder %s39, 1
      %p361 = por %p359, %p360
      %p362 = scmp.ne.s32.totalorder %s353, %s354
      %p363 = scmp.eq.s32.totalorder %s39, 0
      %p364 = por %p362, %p363
      %p365 = scmp.ne.s32.totalorder %s353, %s354
      %p366 = scmp.eq.s32.totalorder %s40, 1
      %p367 = por %p365, %p366
      %p369 = scmp.ne.s32.totalorder %s354, %s368
      %p370 = scmp.eq.s32.totalorder %s40, 0
      %p371 = por %p369, %p370
      %s373 = sadd.s32 %s372, 1
      %p376 = scmp.eq.s32.totalorder %s34, 1
      %p377 = scmp.ne.s32.totalorder %s372, %s374
      %p378 = scmp.eq.s32.totalorder %s34, 0
      %p379 = por %p377, %p378
      %p380 = scmp.ne.s32.totalorder %s372, %s374
      %p381 = scmp.eq.s32.totalorder %s39, 1
      %p382 = por %p380, %p381
      %p383 = scmp.ne.s32.totalorder %s374, %s375
      %p384 = scmp.eq.s32.totalorder %s39, 0
      %p385 = por %p383, %p384
      %p386 = scmp.ne.s32.totalorder %s374, %s375
      %p387 = scmp.eq.s32.totalorder %s40, 1
      %p388 = por %p386, %p387
      %p390 = scmp.ne.s32.totalorder %s375, %s389
      %p391 = scmp.eq.s32.totalorder %s40, 0
      %p392 = por %p390, %p391
      %s394 = sadd.s32 %s393, 1
      %p397 = scmp.eq.s32.totalorder %s34, 1
      %p398 = scmp.ne.s32.totalorder %s393, %s395
      %p399 = scmp.eq.s32.totalorder %s34, 0
      %p400 = por %p398, %p399
      %p401 = scmp.ne.s32.totalorder %s393, %s395
      %p402 = scmp.eq.s32.totalorder %s39, 1
      %p403 = por %p401, %p402
      %p404 = scmp.ne.s32.totalorder %s395, %s396
      %p405 = scmp.eq.s32.totalorder %s39, 0
      %p406 = por %p404, %p405
      %p407 = scmp.ne.s32.totalorder %s395, %s396
      %p408 = scmp.eq.s32.totalorder %s40, 1
      %p409 = por %p407, %p408
      %p411 = scmp.ne.s32.totalorder %s396, %s410
      %p412 = scmp.eq.s32.totalorder %s40, 0
      %p413 = por %p411, %p412
      %s414 = ssub.s32 %s34, %s41
      %p415 = scmp.eq.s32.totalorder %s414, 0
      %s417 = sadd.s32 %s416, 1
      %s418 = scalar_select %p415, %s416, %s417
      %p421 = pneg %p415
      %p422 = scmp.eq.s32.totalorder %s34, 1
      %p423 = por %p421, %p422
      %p424 = scmp.ne.s32.totalorder %s416, %s419
      %p425 = scmp.eq.s32.totalorder %s34, 0
      %p426 = por %p424, %p425
      %p427 = scmp.ne.s32.totalorder %s416, %s419
      %p428 = scmp.eq.s32.totalorder %s39, 1
      %p429 = por %p427, %p428
      %p430 = scmp.ne.s32.totalorder %s419, %s420
      %p431 = scmp.eq.s32.totalorder %s39, 0
      %p432 = por %p430, %p431
      %p433 = scmp.ne.s32.totalorder %s419, %s420
      %p434 = scmp.eq.s32.totalorder %s40, 1
      %p435 = por %p433, %p434
      %p437 = scmp.ne.s32.totalorder %s420, %s436
      %p438 = scmp.eq.s32.totalorder %s40, 0
      %p439 = por %p437, %p438
      %p440 = scmp.le.s32.totalorder 1, %s34
      %p441 = scmp.lt.s32.totalorder %s34, 3
      %p442 = pnand %p440, %p441
      %p443 = pneg %p442
      // Predicated region
      $region9: #{tpu_custom_call.1} parent=5 // pred_check
        _
      $region10: #{tpu_custom_call.1} parent=5 // pred_check_branch
        %445 = sbr.rel (%p442) target = $region12
      $region11: #{tpu_custom_call.1} parent=5 // pred_region
        %s446 = ssub.s32 %s34, 1
        // Predicated region
        $region13: #{tpu_custom_call.1} parent=11 // pred_check
          %p447 = pneg %p133
        $region14: #{tpu_custom_call.1} parent=11 // pred_check_branch
          %449 = sbr.rel (%p447) target = $region16
        $region15: #{tpu_custom_call.1} parent=11 // pred_region
          _
        $region16: #{tpu_custom_call.1} parent=11 // pred_fallthru
          _
        // Predicated region
        $region17: #{tpu_custom_call.1} parent=11 // pred_check
          %p450 = pneg %p154
        $region18: #{tpu_custom_call.1} parent=11 // pred_check_branch
          %452 = sbr.rel (%p450) target = $region20
        $region19: #{tpu_custom_call.1} parent=11 // pred_region
          %s454 = ssub.s32 32, 32
          %455 = vsyncadd [#allocation6], %s454
          %s456 = sshll.u32 [#allocation7], 4
          %s457 = int_to_ptr.vmem [resolvable:$true] %s456
          %462 = dma.hbm_to_vmem [thread:$0]  %s4, 32, %s457, [#allocation6], 16, 16, 1
        $region20: #{tpu_custom_call.1} parent=11 // pred_fallthru
          _
        // Predicated region
        $region21: #{tpu_custom_call.1} parent=11 // pred_check
          %p463 = pneg %p175
        $region22: #{tpu_custom_call.1} parent=11 // pred_check_branch
          %465 = sbr.rel (%p463) target = $region24
        $region23: #{tpu_custom_call.1} parent=11 // pred_region
          _
        $region24: #{tpu_custom_call.1} parent=11 // pred_fallthru
          _
        // Predicated region
        $region25: #{tpu_custom_call.1} parent=11 // pred_check
          %p466 = pneg %p196
        $region26: #{tpu_custom_call.1} parent=11 // pred_check_branch
          %468 = sbr.rel (%p466) target = $region28
        $region27: #{tpu_custom_call.1} parent=11 // pred_region
          %s470 = ssub.s32 32, 32
          %471 = vsyncadd [#allocation9], %s470
          %s472 = sshll.u32 [#allocation8], 4
          %s473 = int_to_ptr.vmem [resolvable:$true] %s472
          %478 = dma.hbm_to_vmem [thread:$0]  %s6, 32, %s473, [#allocation9], 16, 16, 1
        $region28: #{tpu_custom_call.1} parent=11 // pred_fallthru
          _
        // Predicated region
        $region29: #{tpu_custom_call.1} parent=11 // pred_check
          %p479 = pneg %p217
        $region30: #{tpu_custom_call.1} parent=11 // pred_check_branch
          %481 = sbr.rel (%p479) target = $region32
        $region31: #{tpu_custom_call.1} parent=11 // pred_region
          %s483 = ssub.s32 32, 32
          %484 = vsyncadd [#allocation9], %s483
          %s485 = sshll.u32 [#allocation10], 4
          %s486 = int_to_ptr.vmem [resolvable:$true] %s485
          %491 = dma.hbm_to_vmem [thread:$0]  %s7, 32, %s486, [#allocation9], 16, 16, 1
        $region32: #{tpu_custom_call.1} parent=11 // pred_fallthru
          _
        // Predicated region
        $region33: #{tpu_custom_call.1} parent=11 // pred_check
          %p492 = pneg %p238
        $region34: #{tpu_custom_call.1} parent=11 // pred_check_branch
          %494 = sbr.rel (%p492) target = $region36
        $region35: #{tpu_custom_call.1} parent=11 // pred_region
          %s496 = ssub.s32 32, 32
          %497 = vsyncadd [#allocation12], %s496
          %s498 = sshll.u32 [#allocation11], 4
          %s499 = int_to_ptr.vmem [resolvable:$true] %s498
          %504 = dma.hbm_to_vmem [thread:$0]  %s8, 32, %s499, [#allocation12], 16, 16, 1
        $region36: #{tpu_custom_call.1} parent=11 // pred_fallthru
          _
        // Predicated region
        $region37: #{tpu_custom_call.1} parent=11 // pred_check
          %p505 = pneg %p259
        $region38: #{tpu_custom_call.1} parent=11 // pred_check_branch
          %507 = sbr.rel (%p505) target = $region40
        $region39: #{tpu_custom_call.1} parent=11 // pred_region
          _
        $region40: #{tpu_custom_call.1} parent=11 // pred_fallthru
          _
        // Predicated region
        $region41: #{tpu_custom_call.1} parent=11 // pred_check
          %p508 = pneg %p280
        $region42: #{tpu_custom_call.1} parent=11 // pred_check_branch
          %510 = sbr.rel (%p508) target = $region44
        $region43: #{tpu_custom_call.1} parent=11 // pred_region
          _
        $region44: #{tpu_custom_call.1} parent=11 // pred_fallthru
          _
        // Predicated region
        $region45: #{tpu_custom_call.1} parent=11 // pred_check
          %p511 = pneg %p301
        $region46: #{tpu_custom_call.1} parent=11 // pred_check_branch
          %513 = sbr.rel (%p511) target = $region48
        $region47: #{tpu_custom_call.1} parent=11 // pred_region
          _
        $region48: #{tpu_custom_call.1} parent=11 // pred_fallthru
          _
        // Predicated region
        $region49: #{tpu_custom_call.1} parent=11 // pred_check
          %p514 = pneg %p322
        $region50: #{tpu_custom_call.1} parent=11 // pred_check_branch
          %516 = sbr.rel (%p514) target = $region52
        $region51: #{tpu_custom_call.1} parent=11 // pred_region
          _
        $region52: #{tpu_custom_call.1} parent=11 // pred_fallthru
          _
        // Predicated region
        $region53: #{tpu_custom_call.1} parent=11 // pred_check
          %p517 = pneg %p343
        $region54: #{tpu_custom_call.1} parent=11 // pred_check_branch
          %519 = sbr.rel (%p517) target = $region56
        $region55: #{tpu_custom_call.1} parent=11 // pred_region
          _
        $region56: #{tpu_custom_call.1} parent=11 // pred_fallthru
          _
        // Predicated region
        $region57: #{tpu_custom_call.1} parent=11 // pred_check
          %p520 = pneg %p364
        $region58: #{tpu_custom_call.1} parent=11 // pred_check_branch
          %522 = sbr.rel (%p520) target = $region60
        $region59: #{tpu_custom_call.1} parent=11 // pred_region
          _
        $region60: #{tpu_custom_call.1} parent=11 // pred_fallthru
          _
        // Predicated region
        $region61: #{tpu_custom_call.1} parent=11 // pred_check
          %p523 = pneg %p385
        $region62: #{tpu_custom_call.1} parent=11 // pred_check_branch
          %525 = sbr.rel (%p523) target = $region64
        $region63: #{tpu_custom_call.1} parent=11 // pred_region
          _
        $region64: #{tpu_custom_call.1} parent=11 // pred_fallthru
          _
        // Predicated region
        $region65: #{tpu_custom_call.1} parent=11 // pred_check
          %p526 = pneg %p406
        $region66: #{tpu_custom_call.1} parent=11 // pred_check_branch
          %528 = sbr.rel (%p526) target = $region68
        $region67: #{tpu_custom_call.1} parent=11 // pred_region
          _
        $region68: #{tpu_custom_call.1} parent=11 // pred_fallthru
          _
      $region12: #{tpu_custom_call.1} parent=5 // pred_fallthru
        _
      %p529 = scmp.lt.s32.totalorder %s34, 2
      // Predicated region
      $region69: #{tpu_custom_call.1} parent=5 // pred_check
        %p530 = pneg %p529
      $region70: #{tpu_custom_call.1} parent=5 // pred_check_branch
        %532 = sbr.rel (%p530) target = $region72
      $region71: #{tpu_custom_call.1} parent=5 // pred_region
        // Predicated region
        $region73: #{tpu_custom_call.1} parent=71 // pred_check
          %p533 = pneg %p54
        $region74: #{tpu_custom_call.1} parent=71 // pred_check_branch
          %535 = sbr.rel (%p533) target = $region76
        $region75: #{tpu_custom_call.1} parent=71 // pred_region
          %s536 = sand.u32 %s44, 1
          %s537 = scalar_lea.sflag [#allocation3], %s536
          %s538 = sand.u32 %s44, 1
          %s539 = smul.addr %s538, 8
          %s540 = scalar_lea.vmem [#allocation2], %s539
          %s542 = ssub.s32 128, 128
          %543 = vsyncadd %s537, %s542
          %s544 = smul.addr %s34, 128
          %s545 = scalar_lea.hbm %s0, %s544
          %s547 = sshll.u32 %s540, 4
          %s548 = int_to_ptr.vmem [resolvable:$true] %s547
          %550 = dma.hbm_to_vmem [thread:$0]  %s545, 128, %s548, %s537
        $region76: #{tpu_custom_call.1} parent=71 // pred_fallthru
          _
        // Predicated region
        $region77: #{tpu_custom_call.1} parent=71 // pred_check
          %p551 = pneg %p80
        $region78: #{tpu_custom_call.1} parent=71 // pred_check_branch
          %553 = sbr.rel (%p551) target = $region80
        $region79: #{tpu_custom_call.1} parent=71 // pred_region
          %s554 = sand.u32 %s34, 1
          %s555 = scalar_lea.sflag [#allocation6], %s554
          %s556 = sand.u32 %s70, 1
          %s557 = smul.addr %s556, 8
          %s558 = scalar_lea.vmem [#allocation5], %s557
          %s560 = ssub.s32 128, 128
          %561 = vsyncadd %s555, %s560
          %s562 = smul.addr %s34, 128
          %s563 = scalar_lea.hbm %s1, %s562
          %s565 = sshll.u32 %s558, 4
          %s566 = int_to_ptr.vmem [resolvable:$true] %s565
          %568 = dma.hbm_to_vmem [thread:$0]  %s563, 128, %s566, %s555
        $region80: #{tpu_custom_call.1} parent=71 // pred_fallthru
          _
        // Predicated region
        $region81: #{tpu_custom_call.1} parent=71 // pred_check
          %p569 = pneg %p106
        $region82: #{tpu_custom_call.1} parent=71 // pred_check_branch
          %571 = sbr.rel (%p569) target = $region84
        $region83: #{tpu_custom_call.1} parent=71 // pred_region
          %p572 = scmp.lt.s32.totalorder %s34, 1
          %s573 = scalar_select %p572, %s34, 1
          %s574 = scalar_lea.vmem %s2, %s573
        $region84: #{tpu_custom_call.1} parent=71 // pred_fallthru
          _
      $region72: #{tpu_custom_call.1} parent=5 // pred_fallthru
        _
      %p575 = scmp.le.s32.totalorder 1, %s34
      %p576 = scmp.lt.s32.totalorder %s34, 3
      %p577 = pnand %p575, %p576
      %p578 = pneg %p577
      // Predicated region
      $region85: #{tpu_custom_call.1} parent=5 // pred_check
        _
      $region86: #{tpu_custom_call.1} parent=5 // pred_check_branch
        %580 = sbr.rel (%p577) target = $region88
      $region87: #{tpu_custom_call.1} parent=5 // pred_region
        %s581 = ssub.s32 %s34, 1
        %s582 = sand.u32 %s47, 1
        %s583 = scalar_lea.sflag [#allocation3], %s582
        %s584 = sand.u32 %s47, 1
        %s585 = smul.addr %s584, 8
        %s586 = scalar_lea.vmem [#allocation2], %s585
        // Predicated region
        $region89: #{tpu_custom_call.1} parent=87 // pred_check
          %p587 = pneg %p60
        $region90: #{tpu_custom_call.1} parent=87 // pred_check_branch
          %589 = sbr.rel (%p587) target = $region92
        $region91: #{tpu_custom_call.1} parent=87 // pred_region
          %590 = dma.done %s583, 128
        $region92: #{tpu_custom_call.1} parent=87 // pred_fallthru
          _
        %s591 = sand.u32 %s39, 1
        %s592 = scalar_lea.sflag [#allocation6], %s591
        %s593 = sand.u32 %s73, 1
        %s594 = smul.addr %s593, 8
        %s595 = scalar_lea.vmem [#allocation5], %s594
        // Predicated region
        $region93: #{tpu_custom_call.1} parent=87 // pred_check
          %p596 = pneg %p86
        $region94: #{tpu_custom_call.1} parent=87 // pred_check_branch
          %598 = sbr.rel (%p596) target = $region96
        $region95: #{tpu_custom_call.1} parent=87 // pred_region
          %599 = dma.done %s592, 128
        $region96: #{tpu_custom_call.1} parent=87 // pred_fallthru
          _
        // Predicated region
        $region97: #{tpu_custom_call.1} parent=87 // pred_check
          %p600 = pneg %p154
        $region98: #{tpu_custom_call.1} parent=87 // pred_check_branch
          %602 = sbr.rel (%p600) target = $region100
        $region99: #{tpu_custom_call.1} parent=87 // pred_region
          %603 = dma.done [#allocation6], 32
        $region100: #{tpu_custom_call.1} parent=87 // pred_fallthru
          _
        // Predicated region
        $region101: #{tpu_custom_call.1} parent=87 // pred_check
          %p604 = pneg %p196
        $region102: #{tpu_custom_call.1} parent=87 // pred_check_branch
          %606 = sbr.rel (%p604) target = $region104
        $region103: #{tpu_custom_call.1} parent=87 // pred_region
          %607 = dma.done [#allocation9], 32
        $region104: #{tpu_custom_call.1} parent=87 // pred_fallthru
          _
        // Predicated region
        $region105: #{tpu_custom_call.1} parent=87 // pred_check
          %p608 = pneg %p217
        $region106: #{tpu_custom_call.1} parent=87 // pred_check_branch
          %610 = sbr.rel (%p608) target = $region108
        $region107: #{tpu_custom_call.1} parent=87 // pred_region
          %611 = dma.done [#allocation9], 32
        $region108: #{tpu_custom_call.1} parent=87 // pred_fallthru
          _
        // Predicated region
        $region109: #{tpu_custom_call.1} parent=87 // pred_check
          %p612 = pneg %p238
        $region110: #{tpu_custom_call.1} parent=87 // pred_check_branch
          %614 = sbr.rel (%p612) target = $region112
        $region111: #{tpu_custom_call.1} parent=87 // pred_region
          %615 = dma.done [#allocation12], 32
        $region112: #{tpu_custom_call.1} parent=87 // pred_fallthru
          _
        %s616 = sand.u32 %s47, 1
        %s617 = scalar_lea.sflag [#allocation3], %s616
        %s618 = sand.u32 %s47, 1
        %s619 = smul.addr %s618, 8
        %s620 = scalar_lea.vmem [#allocation2], %s619
        %p621 = pneg %p60
        %p622 = pneg %p57
        %s623 = sand.u32 %s39, 1
        %s624 = scalar_lea.sflag [#allocation6], %s623
        %s625 = sand.u32 %s73, 1
        %s626 = smul.addr %s625, 8
        %s627 = scalar_lea.vmem [#allocation5], %s626
        %p628 = pneg %p86
        %p629 = pneg %p83
        %p630 = scmp.lt.s32.totalorder %s39, 1
        %s631 = scalar_select %p630, %s39, 1
        %s632 = scalar_lea.vmem %s2, %s631
        %p633 = pneg %p112
        %p634 = pneg %p109
        %p635 = pneg %p133
        %p636 = pneg %p130
        %p637 = pneg %p154
        %p638 = pneg %p151
        %p639 = pneg %p175
        %p640 = pneg %p172
        %p641 = pneg %p196
        %p642 = pneg %p193
        %p643 = pneg %p217
        %p644 = pneg %p214
        %p645 = pneg %p238
        %p646 = pneg %p235
        %p647 = pneg %p259
        %p648 = pneg %p256
        %p649 = pneg %p280
        %p650 = pneg %p277
        %p651 = pneg %p301
        %p652 = pneg %p298
        %p653 = pneg %p322
        %p654 = pneg %p319
        %p655 = pneg %p343
        %p656 = pneg %p340
        %p657 = pneg %p364
        %p658 = pneg %p361
        %p659 = pneg %p385
        %p660 = pneg %p382
        %p661 = pneg %p406
        %p662 = pneg %p403
        %p663 = pneg %p432
        %p664 = pneg %p429
        %s665 = sand.u32 %s419, 1
        %s666 = scalar_lea.sflag [#allocation4], %s665
        %s667 = sand.u32 %s419, 1
        %s668 = smul.addr %s667, 8
        %s669 = scalar_lea.vmem [#allocation13], %s668
        %p670 = scmp.lt.s32.totalorder %s39, 1
        %s671 = scalar_select %p670, %s39, 1
        %s672 = scalar_lea.vmem %s2, %s671
        %v673 = vld [vmem:[%s586] sm:$0xff]
        %v674 = vld [vmem:[%s595] sm:$0xff]
        %v675 = vmul.f32 %v673, %v674
        %v676 = vmul.f32 %v675, 0.17677669
        %v677 = vadd.f32 %v676, %v674
        %v678 = vld [vmem:[%s672] sm:$0x1]
        loop: start=0, step=1, limit=2
        $region113: #{tpu_custom_call.1} parent=87 // loop_pre_header
          _
        $region114: #{tpu_custom_call.1} parent=87 // loop_header
          %s680 = sphi 0, %s684
          %p681 = scmp.ge.s32.totalorder %s680, 2
          %v685 = vphi %v677, %v2345
        $region115: #{tpu_custom_call.1} parent=87 // loop_header_branch
          %683 = sbr.rel (%p681) target = $region119
        $region116: #{tpu_custom_call.1} parent=87 // loop_body
          %s686 = smul.u32 %s680, 32
          %s687 = scalar_lea.vmem %s3, %s686
          %v688 = vld [vmem:[%s687] sm:$0xff]
          %v689 = vld [vmem:[%s687 + $0x8] sm:$0xff]
          %v690 = vld [vmem:[%s687 + $0x10] sm:$0xff]
          %v691 = vld [vmem:[%s687 + $0x18] sm:$0xff]
          %s692 = scalar_lea.vmem [#allocation7], %s680
          %v693 = vld [vmem:[%s692] sm:$0x1]
          %v695 = vlaneseq
          %v696 = vshrl.u32 %v695, 7
          %v697 = vsub.s32 0, %v696
          %v698 = vrot.slane %v693, %v697
          %vm700 = vcmask 261120
          %v702 = vsel %vm700, %v685, 0
          %704 = vmatprep.subr.mxu0 0.0
          %705 = vmatpush1.msra.mxu0 %v688
          %706 = vmatprep.subr.mxu0 0.0
          %707 = vmatpush1.msra.mxu0 %v689
          %708 = vmatprep.subr.mxu0 0.0
          %709 = vmatpush1.msra.mxu0 %v690
          %710 = vmatprep.subr.mxu0 0.0
          %711 = vmatpush1.msra.mxu0 %v691
          %712 = vmatprep.subr.mxu0 0.0
          %713 = vmatpush1.msra.mxu0 0.0
          %714 = vmatprep.subr.mxu0 0.0
          %715 = vmatpush1.msra.mxu0 0.0
          %716 = vmatprep.subr.mxu0 0.0
          %717 = vmatpush1.msra.mxu0 0.0
          %718 = vmatprep.subr.mxu0 0.0
          %719 = vmatpush1.msra.mxu0 0.0
          %720 = vmatprep.subr.mxu0 0.0
          %721 = vmatpush1.msra.mxu0 0.0
          %722 = vmatprep.subr.mxu0 0.0
          %723 = vmatpush1.msra.mxu0 0.0
          %724 = vmatprep.subr.mxu0 0.0
          %725 = vmatpush1.msra.mxu0 0.0
          %726 = vmatprep.subr.mxu0 0.0
          %727 = vmatpush1.msra.mxu0 0.0
          %728 = vmatprep.subr.mxu0 0.0
          %729 = vmatpush1.msra.mxu0 0.0
          %730 = vmatprep.subr.mxu0 0.0
          %731 = vmatpush1.msra.mxu0 0.0
          %732 = vmatprep.subr.mxu0 0.0
          %733 = vmatpush1.msra.mxu0 0.0
          %734 = vmatprep.subr.mxu0 0.0
          %735 = vmatpush1.msra.mxu0 0.0
          %736 = vmatprep.subr.mxu0 0.0
          %737 = vmatpush1.msra.mxu0 0.0
          %738 = vmatprep.subr.mxu0 0.0
          %739 = vmatpush1.msra.mxu0 0.0
          %740 = vmatprep.subr.mxu0 0.0
          %741 = vmatpush1.msra.mxu0 0.0
          %742 = vmatprep.subr.mxu0 0.0
          %743 = vmatpush1.msra.mxu0 0.0
          %744 = vmatprep.subr.mxu0 0.0
          %745 = vmatpush1.msra.mxu0 0.0
          %746 = vmatprep.subr.mxu0 0.0
          %747 = vmatpush1.msra.mxu0 0.0
          %748 = vmatprep.subr.mxu0 0.0
          %749 = vmatpush1.msra.mxu0 0.0
          %750 = vmatprep.subr.mxu0 0.0
          %751 = vmatpush1.msra.mxu0 0.0
          %752 = vmatprep.subr.mxu0 0.0
          %753 = vmatpush1.msra.mxu0 0.0
          %754 = vmatprep.subr.mxu0 0.0
          %755 = vmatpush1.msra.mxu0 0.0
          %756 = vmatprep.subr.mxu0 0.0
          %757 = vmatpush1.msra.mxu0 0.0
          %758 = vmatprep.subr.mxu0 0.0
          %759 = vmatpush1.msra.mxu0 0.0
          %760 = vmatprep.subr.mxu0 0.0
          %761 = vmatpush1.msra.mxu0 0.0
          %762 = vmatprep.subr.mxu0 0.0
          %763 = vmatpush1.msra.mxu0 0.0
          %764 = vmatprep.subr.mxu0 0.0
          %765 = vmatpush1.msra.mxu0 0.0
          %766 = vmatprep.subr.mxu0 0.0
          %767 = vmatpush1.msra.mxu0 0.0
          %768 = vmatprep.mubr.f32.mxu0 0.0
          %769 = vmatmul.mubr.f32.gmra.mrb[0].mxu0 %v702
          %v770 = vpop.f32.mrb[0].mxu0
          %v771 = vadd.f32 %v698, %v770
          %v772 = vpop.f32.mrb[0].mxu0
          %773 = vdwg.mxu0
          %775 = vrot.lane.b32.xlu0 %v771, 120
          %v776 = vpop.permute.xlu0 %775
          %778 = vrot.lane.b32.xlu0 %v771, 112
          %v779 = vpop.permute.xlu0 %778
          %781 = vrot.lane.b32.xlu0 %v771, 104
          %v782 = vpop.permute.xlu0 %781
          %784 = vrot.lane.b32.xlu0 %v771, 96
          %v785 = vpop.permute.xlu0 %784
          %787 = vrot.lane.b32.xlu0 %v771, 88
          %v788 = vpop.permute.xlu0 %787
          %790 = vrot.lane.b32.xlu0 %v771, 80
          %v791 = vpop.permute.xlu0 %790
          %793 = vrot.lane.b32.xlu0 %v771, 72
          %v794 = vpop.permute.xlu0 %793
          %796 = vrot.lane.b32.xlu0 %v771, 64
          %v797 = vpop.permute.xlu0 %796
          %799 = vrot.lane.b32.xlu0 %v771, 56
          %v800 = vpop.permute.xlu0 %799
          %802 = vrot.lane.b32.xlu0 %v771, 48
          %v803 = vpop.permute.xlu0 %802
          %805 = vrot.lane.b32.xlu0 %v771, 40
          %v806 = vpop.permute.xlu0 %805
          %v808 = vcombine.low %v771, %v779
          %v809 = vcombine.high %v771, %v779
          %v811 = vunpack.c.l.s4 1983009808
          %v812 = vunpack.c.0.s8 %v811
          %v813 = vlaneseq
          %v814 = vshrl.u32 %v813, 7
          %v815 = vsub.s32 %v812, %v814
          %v816 = vrot.slane %v808, %v815
          %v818 = vunpack.c.l.s4 1983009808
          %v819 = vunpack.c.0.s8 %v818
          %v820 = vlaneseq
          %v821 = vshrl.u32 %v820, 7
          %v822 = vsub.s32 %v819, %v821
          %v823 = vrot.slane %v809, %v822
          %v824 = vcombine.low %v776, %v782
          %v825 = vcombine.high %v776, %v782
          %v827 = vunpack.c.l.s4 1983009808
          %v828 = vunpack.c.0.s8 %v827
          %v829 = vlaneseq
          %v830 = vshrl.u32 %v829, 7
          %v831 = vsub.s32 %v828, %v830
          %v832 = vrot.slane %v824, %v831
          %v834 = vunpack.c.l.s4 1983009808
          %v835 = vunpack.c.0.s8 %v834
          %v836 = vlaneseq
          %v837 = vshrl.u32 %v836, 7
          %v838 = vsub.s32 %v835, %v837
          %v839 = vrot.slane %v825, %v838
          %v840 = vcombine.low %v785, %v791
          %v841 = vcombine.high %v785, %v791
          %v843 = vunpack.c.l.s4 1983009808
          %v844 = vunpack.c.0.s8 %v843
          %v845 = vlaneseq
          %v846 = vshrl.u32 %v845, 7
          %v847 = vsub.s32 %v844, %v846
          %v848 = vrot.slane %v840, %v847
          %v850 = vunpack.c.l.s4 1983009808
          %v851 = vunpack.c.0.s8 %v850
          %v852 = vlaneseq
          %v853 = vshrl.u32 %v852, 7
          %v854 = vsub.s32 %v851, %v853
          %v855 = vrot.slane %v841, %v854
          %v856 = vcombine.low %v788, %v794
          %v857 = vcombine.high %v788, %v794
          %v859 = vunpack.c.l.s4 1983009808
          %v860 = vunpack.c.0.s8 %v859
          %v861 = vlaneseq
          %v862 = vshrl.u32 %v861, 7
          %v863 = vsub.s32 %v860, %v862
          %v864 = vrot.slane %v856, %v863
          %v866 = vunpack.c.l.s4 1983009808
          %v867 = vunpack.c.0.s8 %v866
          %v868 = vlaneseq
          %v869 = vshrl.u32 %v868, 7
          %v870 = vsub.s32 %v867, %v869
          %v871 = vrot.slane %v857, %v870
          %v872 = vcombine.low %v816, %v832
          %v873 = vcombine.high %v816, %v832
          %v875 = vunpack.c.l.s4 1934713408
          %v876 = vunpack.c.0.s8 %v875
          %v877 = vlaneseq
          %v878 = vshrl.u32 %v877, 7
          %v879 = vsub.s32 %v876, %v878
          %v880 = vrot.slane %v872, %v879
          %v882 = vunpack.c.l.s4 1934713408
          %v883 = vunpack.c.0.s8 %v882
          %v884 = vlaneseq
          %v885 = vshrl.u32 %v884, 7
          %v886 = vsub.s32 %v883, %v885
          %v887 = vrot.slane %v873, %v886
          %v888 = vcombine.low %v823, %v839
          %v889 = vcombine.high %v823, %v839
          %v891 = vunpack.c.l.s4 1934713408
          %v892 = vunpack.c.0.s8 %v891
          %v893 = vlaneseq
          %v894 = vshrl.u32 %v893, 7
          %v895 = vsub.s32 %v892, %v894
          %v896 = vrot.slane %v888, %v895
          %v898 = vunpack.c.l.s4 1934713408
          %v899 = vunpack.c.0.s8 %v898
          %v900 = vlaneseq
          %v901 = vshrl.u32 %v900, 7
          %v902 = vsub.s32 %v899, %v901
          %v903 = vrot.slane %v889, %v902
          %v904 = vcombine.low %v848, %v864
          %v905 = vcombine.high %v848, %v864
          %v907 = vunpack.c.l.s4 1934713408
          %v908 = vunpack.c.0.s8 %v907
          %v909 = vlaneseq
          %v910 = vshrl.u32 %v909, 7
          %v911 = vsub.s32 %v908, %v910
          %v912 = vrot.slane %v904, %v911
          %v914 = vunpack.c.l.s4 1934713408
          %v915 = vunpack.c.0.s8 %v914
          %v916 = vlaneseq
          %v917 = vshrl.u32 %v916, 7
          %v918 = vsub.s32 %v915, %v917
          %v919 = vrot.slane %v905, %v918
          %v920 = vcombine.low %v855, %v871
          %v921 = vcombine.high %v855, %v871
          %v923 = vunpack.c.l.s4 1934713408
          %v924 = vunpack.c.0.s8 %v923
          %v925 = vlaneseq
          %v926 = vshrl.u32 %v925, 7
          %v927 = vsub.s32 %v924, %v926
          %v928 = vrot.slane %v920, %v927
          %v930 = vunpack.c.l.s4 1934713408
          %v931 = vunpack.c.0.s8 %v930
          %v932 = vlaneseq
          %v933 = vshrl.u32 %v932, 7
          %v934 = vsub.s32 %v931, %v933
          %v935 = vrot.slane %v921, %v934
          %v936 = vcombine.low %v880, %v912
          %v937 = vcombine.high %v880, %v912
          %v938 = vcombine.low %v887, %v919
          %v939 = vcombine.high %v887, %v919
          %v940 = vcombine.low %v896, %v928
          %v941 = vcombine.high %v896, %v928
          %v942 = vcombine.low %v903, %v935
          %v943 = vcombine.high %v903, %v935
          %v944 = vcombine.low %v797, %v803
          %v945 = vcombine.high %v797, %v803
          %v947 = vunpack.c.l.s4 1983009808
          %v948 = vunpack.c.0.s8 %v947
          %v949 = vlaneseq
          %v950 = vshrl.u32 %v949, 7
          %v951 = vsub.s32 %v948, %v950
          %v952 = vrot.slane %v944, %v951
          %v954 = vunpack.c.l.s4 1983009808
          %v955 = vunpack.c.0.s8 %v954
          %v956 = vlaneseq
          %v957 = vshrl.u32 %v956, 7
          %v958 = vsub.s32 %v955, %v957
          %v959 = vrot.slane %v945, %v958
          %v960 = vcombine.low %v800, %v806
          %v961 = vcombine.high %v800, %v806
          %v963 = vunpack.c.l.s4 1983009808
          %v964 = vunpack.c.0.s8 %v963
          %v965 = vlaneseq
          %v966 = vshrl.u32 %v965, 7
          %v967 = vsub.s32 %v964, %v966
          %v968 = vrot.slane %v960, %v967
          %v970 = vunpack.c.l.s4 1983009808
          %v971 = vunpack.c.0.s8 %v970
          %v972 = vlaneseq
          %v973 = vshrl.u32 %v972, 7
          %v974 = vsub.s32 %v971, %v973
          %v975 = vrot.slane %v961, %v974
          %v976 = vcombine.low %v952, %v968
          %v977 = vcombine.high %v952, %v968
          %v979 = vunpack.c.l.s4 1934713408
          %v980 = vunpack.c.0.s8 %v979
          %v981 = vlaneseq
          %v982 = vshrl.u32 %v981, 7
          %v983 = vsub.s32 %v980, %v982
          %v984 = vrot.slane %v976, %v983
          %v986 = vunpack.c.l.s4 1934713408
          %v987 = vunpack.c.0.s8 %v986
          %v988 = vlaneseq
          %v989 = vshrl.u32 %v988, 7
          %v990 = vsub.s32 %v987, %v989
          %v991 = vrot.slane %v977, %v990
          %v992 = vcombine.low %v959, %v975
          %v993 = vcombine.high %v959, %v975
          %v995 = vunpack.c.l.s4 1934713408
          %v996 = vunpack.c.0.s8 %v995
          %v997 = vlaneseq
          %v998 = vshrl.u32 %v997, 7
          %v999 = vsub.s32 %v996, %v998
          %v1000 = vrot.slane %v992, %v999
          %v1002 = vunpack.c.l.s4 1934713408
          %v1003 = vunpack.c.0.s8 %v1002
          %v1004 = vlaneseq
          %v1005 = vshrl.u32 %v1004, 7
          %v1006 = vsub.s32 %v1003, %v1005
          %v1007 = vrot.slane %v993, %v1006
          %v1008 = vcombine.high %v984, 0.0
          %v1009 = vcombine.high %v991, 0.0
          %v1010 = vcombine.high %v1000, 0.0
          %v1011 = vcombine.high %v1007, 0.0
          %v1012 = vcombine.low %v936, %v938
          %v1013 = vcombine.high %v936, %v938
          %v1015 = vunpack.c.l.s4 1983009808
          %v1016 = vunpack.c.0.s8 %v1015
          %v1017 = vlaneseq
          %v1018 = vshrl.u32 %v1017, 7
          %v1019 = vsub.s32 %v1016, %v1018
          %v1020 = vrot.slane %v1012, %v1019
          %v1022 = vunpack.c.l.s4 1983009808
          %v1023 = vunpack.c.0.s8 %v1022
          %v1024 = vlaneseq
          %v1025 = vshrl.u32 %v1024, 7
          %v1026 = vsub.s32 %v1023, %v1025
          %v1027 = vrot.slane %v1013, %v1026
          %v1028 = vcombine.low %v937, %v939
          %v1029 = vcombine.high %v937, %v939
          %v1031 = vunpack.c.l.s4 1983009808
          %v1032 = vunpack.c.0.s8 %v1031
          %v1033 = vlaneseq
          %v1034 = vshrl.u32 %v1033, 7
          %v1035 = vsub.s32 %v1032, %v1034
          %v1036 = vrot.slane %v1028, %v1035
          %v1038 = vunpack.c.l.s4 1983009808
          %v1039 = vunpack.c.0.s8 %v1038
          %v1040 = vlaneseq
          %v1041 = vshrl.u32 %v1040, 7
          %v1042 = vsub.s32 %v1039, %v1041
          %v1043 = vrot.slane %v1029, %v1042
          %v1044 = vcombine.low %v940, %v942
          %v1045 = vcombine.high %v940, %v942
          %v1047 = vunpack.c.l.s4 1983009808
          %v1048 = vunpack.c.0.s8 %v1047
          %v1049 = vlaneseq
          %v1050 = vshrl.u32 %v1049, 7
          %v1051 = vsub.s32 %v1048, %v1050
          %v1052 = vrot.slane %v1044, %v1051
          %v1054 = vunpack.c.l.s4 1983009808
          %v1055 = vunpack.c.0.s8 %v1054
          %v1056 = vlaneseq
          %v1057 = vshrl.u32 %v1056, 7
          %v1058 = vsub.s32 %v1055, %v1057
          %v1059 = vrot.slane %v1045, %v1058
          %v1060 = vcombine.low %v941, %v943
          %v1061 = vcombine.high %v941, %v943
          %v1063 = vunpack.c.l.s4 1983009808
          %v1064 = vunpack.c.0.s8 %v1063
          %v1065 = vlaneseq
          %v1066 = vshrl.u32 %v1065, 7
          %v1067 = vsub.s32 %v1064, %v1066
          %v1068 = vrot.slane %v1060, %v1067
          %v1070 = vunpack.c.l.s4 1983009808
          %v1071 = vunpack.c.0.s8 %v1070
          %v1072 = vlaneseq
          %v1073 = vshrl.u32 %v1072, 7
          %v1074 = vsub.s32 %v1071, %v1073
          %v1075 = vrot.slane %v1061, %v1074
          %v1076 = vcombine.low %v1020, %v1036
          %v1077 = vcombine.high %v1020, %v1036
          %v1079 = vunpack.c.l.s4 1934713408
          %v1080 = vunpack.c.0.s8 %v1079
          %v1081 = vlaneseq
          %v1082 = vshrl.u32 %v1081, 7
          %v1083 = vsub.s32 %v1080, %v1082
          %v1084 = vrot.slane %v1076, %v1083
          %v1086 = vunpack.c.l.s4 1934713408
          %v1087 = vunpack.c.0.s8 %v1086
          %v1088 = vlaneseq
          %v1089 = vshrl.u32 %v1088, 7
          %v1090 = vsub.s32 %v1087, %v1089
          %v1091 = vrot.slane %v1077, %v1090
          %v1092 = vcombine.low %v1027, %v1043
          %v1093 = vcombine.high %v1027, %v1043
          %v1095 = vunpack.c.l.s4 1934713408
          %v1096 = vunpack.c.0.s8 %v1095
          %v1097 = vlaneseq
          %v1098 = vshrl.u32 %v1097, 7
          %v1099 = vsub.s32 %v1096, %v1098
          %v1100 = vrot.slane %v1092, %v1099
          %v1102 = vunpack.c.l.s4 1934713408
          %v1103 = vunpack.c.0.s8 %v1102
          %v1104 = vlaneseq
          %v1105 = vshrl.u32 %v1104, 7
          %v1106 = vsub.s32 %v1103, %v1105
          %v1107 = vrot.slane %v1093, %v1106
          %v1108 = vcombine.low %v1052, %v1068
          %v1109 = vcombine.high %v1052, %v1068
          %v1111 = vunpack.c.l.s4 1934713408
          %v1112 = vunpack.c.0.s8 %v1111
          %v1113 = vlaneseq
          %v1114 = vshrl.u32 %v1113, 7
          %v1115 = vsub.s32 %v1112, %v1114
          %v1116 = vrot.slane %v1108, %v1115
          %v1118 = vunpack.c.l.s4 1934713408
          %v1119 = vunpack.c.0.s8 %v1118
          %v1120 = vlaneseq
          %v1121 = vshrl.u32 %v1120, 7
          %v1122 = vsub.s32 %v1119, %v1121
          %v1123 = vrot.slane %v1109, %v1122
          %v1124 = vcombine.low %v1059, %v1075
          %v1125 = vcombine.high %v1059, %v1075
          %v1127 = vunpack.c.l.s4 1934713408
          %v1128 = vunpack.c.0.s8 %v1127
          %v1129 = vlaneseq
          %v1130 = vshrl.u32 %v1129, 7
          %v1131 = vsub.s32 %v1128, %v1130
          %v1132 = vrot.slane %v1124, %v1131
          %v1134 = vunpack.c.l.s4 1934713408
          %v1135 = vunpack.c.0.s8 %v1134
          %v1136 = vlaneseq
          %v1137 = vshrl.u32 %v1136, 7
          %v1138 = vsub.s32 %v1135, %v1137
          %v1139 = vrot.slane %v1125, %v1138
          %v1140 = vcombine.low %v1084, %v1116
          %v1141 = vcombine.high %v1084, %v1116
          %v1142 = vcombine.low %v1091, %v1123
          %v1143 = vcombine.high %v1091, %v1123
          %v1144 = vcombine.low %v1100, %v1132
          %v1145 = vcombine.high %v1100, %v1132
          %v1146 = vcombine.low %v1107, %v1139
          %v1147 = vcombine.high %v1107, %v1139
          %v1148 = vcombine.low %v984, %v991
          %v1150 = vunpack.c.l.s4 1983009808
          %v1151 = vunpack.c.0.s8 %v1150
          %v1152 = vlaneseq
          %v1153 = vshrl.u32 %v1152, 7
          %v1154 = vsub.s32 %v1151, %v1153
          %v1155 = vrot.slane %v1148, %v1154
          %v1156 = vcombine.low %v1008, %v1009
          %v1158 = vunpack.c.l.s4 1983009808
          %v1159 = vunpack.c.0.s8 %v1158
          %v1160 = vlaneseq
          %v1161 = vshrl.u32 %v1160, 7
          %v1162 = vsub.s32 %v1159, %v1161
          %v1163 = vrot.slane %v1156, %v1162
          %v1164 = vcombine.low %v1000, %v1007
          %v1166 = vunpack.c.l.s4 1983009808
          %v1167 = vunpack.c.0.s8 %v1166
          %v1168 = vlaneseq
          %v1169 = vshrl.u32 %v1168, 7
          %v1170 = vsub.s32 %v1167, %v1169
          %v1171 = vrot.slane %v1164, %v1170
          %v1172 = vcombine.low %v1010, %v1011
          %v1174 = vunpack.c.l.s4 1983009808
          %v1175 = vunpack.c.0.s8 %v1174
          %v1176 = vlaneseq
          %v1177 = vshrl.u32 %v1176, 7
          %v1178 = vsub.s32 %v1175, %v1177
          %v1179 = vrot.slane %v1172, %v1178
          %v1180 = vcombine.low %v1155, %v1163
          %v1181 = vcombine.high %v1155, %v1163
          %v1183 = vunpack.c.l.s4 1934713408
          %v1184 = vunpack.c.0.s8 %v1183
          %v1185 = vlaneseq
          %v1186 = vshrl.u32 %v1185, 7
          %v1187 = vsub.s32 %v1184, %v1186
          %v1188 = vrot.slane %v1180, %v1187
          %v1190 = vunpack.c.l.s4 1934713408
          %v1191 = vunpack.c.0.s8 %v1190
          %v1192 = vlaneseq
          %v1193 = vshrl.u32 %v1192, 7
          %v1194 = vsub.s32 %v1191, %v1193
          %v1195 = vrot.slane %v1181, %v1194
          %v1196 = vcombine.low %v1171, %v1179
          %v1197 = vcombine.high %v1171, %v1179
          %v1199 = vunpack.c.l.s4 1934713408
          %v1200 = vunpack.c.0.s8 %v1199
          %v1201 = vlaneseq
          %v1202 = vshrl.u32 %v1201, 7
          %v1203 = vsub.s32 %v1200, %v1202
          %v1204 = vrot.slane %v1196, %v1203
          %v1206 = vunpack.c.l.s4 1934713408
          %v1207 = vunpack.c.0.s8 %v1206
          %v1208 = vlaneseq
          %v1209 = vshrl.u32 %v1208, 7
          %v1210 = vsub.s32 %v1207, %v1209
          %v1211 = vrot.slane %v1197, %v1210
          %v1212 = vcombine.low %v1188, %v1204
          %v1213 = vcombine.high %v1188, %v1204
          %v1214 = vcombine.low %v1195, %v1211
          %v1215 = vcombine.high %v1195, %v1211
          %v1217 = vlaneseq
          %v1218 = vshrl.u32 %v1217, 7
          %v1219 = vsub.s32 0, %v1218
          %v1220 = vrot.slane %v678, %v1219
          %vm1222 = vcmask 64512
          %v1224 = vsel %vm1222, %v1140, 0
          %v1227 = vsel %vm1222, %v1144, 0
          %1229 = vmatprep.subr.mxu0 0.0
          %1230 = vmatpush1.xpose.msra.mxu0 %v1227
          %1231 = vmatprep.subr.mxu0 0.0
          %1232 = vmatpush1.xpose.msra.mxu0 0.0
          %1233 = vmatprep.subr.mxu0 0.0
          %1234 = vmatpush1.xpose.msra.mxu0 0.0
          %1235 = vmatprep.subr.mxu0 0.0
          %1236 = vmatpush1.xpose.msra.mxu0 0.0
          %1237 = vmatprep.subr.mxu0 0.0
          %1238 = vmatpush1.xpose.msra.mxu0 0.0
          %1239 = vmatprep.subr.mxu0 0.0
          %1240 = vmatpush1.xpose.msra.mxu0 0.0
          %1241 = vmatprep.subr.mxu0 0.0
          %1242 = vmatpush1.xpose.msra.mxu0 0.0
          %1243 = vmatprep.subr.mxu0 0.0
          %1244 = vmatpush1.xpose.msra.mxu0 0.0
          %1245 = vmatprep.subr.mxu0 0.0
          %1246 = vmatpush1.xpose.msra.mxu0 0.0
          %1247 = vmatprep.subr.mxu0 0.0
          %1248 = vmatpush1.xpose.msra.mxu0 0.0
          %1249 = vmatprep.subr.mxu0 0.0
          %1250 = vmatpush1.xpose.msra.mxu0 0.0
          %1251 = vmatprep.subr.mxu0 0.0
          %1252 = vmatpush1.xpose.msra.mxu0 0.0
          %1253 = vmatprep.subr.mxu0 0.0
          %1254 = vmatpush1.xpose.msra.mxu0 0.0
          %1255 = vmatprep.subr.mxu0 0.0
          %1256 = vmatpush1.xpose.msra.mxu0 0.0
          %1257 = vmatprep.subr.mxu0 0.0
          %1258 = vmatpush1.xpose.msra.mxu0 0.0
          %1259 = vmatprep.subr.mxu0 0.0
          %1260 = vmatpush1.xpose.msra.mxu0 0.0
          %1261 = vmatprep.subr.mxu0 0.0
          %1262 = vmatpush1.xpose.msra.mxu0 0.0
          %1263 = vmatprep.subr.mxu0 0.0
          %1264 = vmatpush1.xpose.msra.mxu0 0.0
          %1265 = vmatprep.subr.mxu0 0.0
          %1266 = vmatpush1.xpose.msra.mxu0 0.0
          %1267 = vmatprep.subr.mxu0 0.0
          %1268 = vmatpush1.xpose.msra.mxu0 0.0
          %1269 = vmatprep.subr.mxu0 0.0
          %1270 = vmatpush1.xpose.msra.mxu0 0.0
          %1271 = vmatprep.subr.mxu0 0.0
          %1272 = vmatpush1.xpose.msra.mxu0 0.0
          %1273 = vmatprep.subr.mxu0 0.0
          %1274 = vmatpush1.xpose.msra.mxu0 0.0
          %1275 = vmatprep.subr.mxu0 0.0
          %1276 = vmatpush1.xpose.msra.mxu0 0.0
          %1277 = vmatprep.subr.mxu0 0.0
          %1278 = vmatpush1.xpose.msra.mxu0 0.0
          %1279 = vmatprep.subr.mxu0 0.0
          %1280 = vmatpush1.xpose.msra.mxu0 0.0
          %1281 = vmatprep.subr.mxu0 0.0
          %1282 = vmatpush1.xpose.msra.mxu0 0.0
          %1283 = vmatprep.subr.mxu0 0.0
          %1284 = vmatpush1.xpose.msra.mxu0 0.0
          %1285 = vmatprep.subr.mxu0 0.0
          %1286 = vmatpush1.xpose.msra.mxu0 0.0
          %1287 = vmatprep.subr.mxu0 0.0
          %1288 = vmatpush1.xpose.msra.mxu0 0.0
          %1289 = vmatprep.subr.mxu0 0.0
          %1290 = vmatpush1.xpose.msra.mxu0 0.0
          %1291 = vmatprep.subr.mxu0 0.0
          %1292 = vmatpush1.xpose.msra.mxu0 0.0
          %1293 = vmatprep.mubr.f32.mxu0 0.0
          %1294 = vmatmul.mubr.f32.gmra.mrb[0].mxu0 %v1224
          %v1295 = vpop.f32.mrb[0].mxu0
          %v1296 = vadd.f32 %v1220, %v1295
          %v1297 = vpop.f32.mrb[0].mxu0
          %1298 = vdwg.mxu0
          %v1300 = vsel %vm1222, %v1141, 0
          %v1303 = vsel %vm1222, %v1145, 0
          %1305 = vmatprep.subr.mxu0 0.0
          %1306 = vmatpush1.xpose.msra.mxu0 %v1303
          %1307 = vmatprep.subr.mxu0 0.0
          %1308 = vmatpush1.xpose.msra.mxu0 0.0
          %1309 = vmatprep.subr.mxu0 0.0
          %1310 = vmatpush1.xpose.msra.mxu0 0.0
          %1311 = vmatprep.subr.mxu0 0.0
          %1312 = vmatpush1.xpose.msra.mxu0 0.0
          %1313 = vmatprep.subr.mxu0 0.0
          %1314 = vmatpush1.xpose.msra.mxu0 0.0
          %1315 = vmatprep.subr.mxu0 0.0
          %1316 = vmatpush1.xpose.msra.mxu0 0.0
          %1317 = vmatprep.subr.mxu0 0.0
          %1318 = vmatpush1.xpose.msra.mxu0 0.0
          %1319 = vmatprep.subr.mxu0 0.0
          %1320 = vmatpush1.xpose.msra.mxu0 0.0
          %1321 = vmatprep.subr.mxu0 0.0
          %1322 = vmatpush1.xpose.msra.mxu0 0.0
          %1323 = vmatprep.subr.mxu0 0.0
          %1324 = vmatpush1.xpose.msra.mxu0 0.0
          %1325 = vmatprep.subr.mxu0 0.0
          %1326 = vmatpush1.xpose.msra.mxu0 0.0
          %1327 = vmatprep.subr.mxu0 0.0
          %1328 = vmatpush1.xpose.msra.mxu0 0.0
          %1329 = vmatprep.subr.mxu0 0.0
          %1330 = vmatpush1.xpose.msra.mxu0 0.0
          %1331 = vmatprep.subr.mxu0 0.0
          %1332 = vmatpush1.xpose.msra.mxu0 0.0
          %1333 = vmatprep.subr.mxu0 0.0
          %1334 = vmatpush1.xpose.msra.mxu0 0.0
          %1335 = vmatprep.subr.mxu0 0.0
          %1336 = vmatpush1.xpose.msra.mxu0 0.0
          %1337 = vmatprep.subr.mxu0 0.0
          %1338 = vmatpush1.xpose.msra.mxu0 0.0
          %1339 = vmatprep.subr.mxu0 0.0
          %1340 = vmatpush1.xpose.msra.mxu0 0.0
          %1341 = vmatprep.subr.mxu0 0.0
          %1342 = vmatpush1.xpose.msra.mxu0 0.0
          %1343 = vmatprep.subr.mxu0 0.0
          %1344 = vmatpush1.xpose.msra.mxu0 0.0
          %1345 = vmatprep.subr.mxu0 0.0
          %1346 = vmatpush1.xpose.msra.mxu0 0.0
          %1347 = vmatprep.subr.mxu0 0.0
          %1348 = vmatpush1.xpose.msra.mxu0 0.0
          %1349 = vmatprep.subr.mxu0 0.0
          %1350 = vmatpush1.xpose.msra.mxu0 0.0
          %1351 = vmatprep.subr.mxu0 0.0
          %1352 = vmatpush1.xpose.msra.mxu0 0.0
          %1353 = vmatprep.subr.mxu0 0.0
          %1354 = vmatpush1.xpose.msra.mxu0 0.0
          %1355 = vmatprep.subr.mxu0 0.0
          %1356 = vmatpush1.xpose.msra.mxu0 0.0
          %1357 = vmatprep.subr.mxu0 0.0
          %1358 = vmatpush1.xpose.msra.mxu0 0.0
          %1359 = vmatprep.subr.mxu0 0.0
          %1360 = vmatpush1.xpose.msra.mxu0 0.0
          %1361 = vmatprep.subr.mxu0 0.0
          %1362 = vmatpush1.xpose.msra.mxu0 0.0
          %1363 = vmatprep.subr.mxu0 0.0
          %1364 = vmatpush1.xpose.msra.mxu0 0.0
          %1365 = vmatprep.subr.mxu0 0.0
          %1366 = vmatpush1.xpose.msra.mxu0 0.0
          %1367 = vmatprep.subr.mxu0 0.0
          %1368 = vmatpush1.xpose.msra.mxu0 0.0
          %1369 = vmatprep.mubr.f32.mxu0 0.0
          %1370 = vmatmul.mubr.f32.gmra.mrb[0].mxu0 %v1300
          %v1371 = vpop.f32.mrb[0].mxu0
          %v1372 = vadd.f32 %v1220, %v1371
          %v1373 = vpop.f32.mrb[0].mxu0
          %1374 = vdwg.mxu0
          %v1376 = vsel %vm1222, %v1142, 0
          %v1379 = vsel %vm1222, %v1146, 0
          %1381 = vmatprep.subr.mxu0 0.0
          %1382 = vmatpush1.xpose.msra.mxu0 %v1379
          %1383 = vmatprep.subr.mxu0 0.0
          %1384 = vmatpush1.xpose.msra.mxu0 0.0
          %1385 = vmatprep.subr.mxu0 0.0
          %1386 = vmatpush1.xpose.msra.mxu0 0.0
          %1387 = vmatprep.subr.mxu0 0.0
          %1388 = vmatpush1.xpose.msra.mxu0 0.0
          %1389 = vmatprep.subr.mxu0 0.0
          %1390 = vmatpush1.xpose.msra.mxu0 0.0
          %1391 = vmatprep.subr.mxu0 0.0
          %1392 = vmatpush1.xpose.msra.mxu0 0.0
          %1393 = vmatprep.subr.mxu0 0.0
          %1394 = vmatpush1.xpose.msra.mxu0 0.0
          %1395 = vmatprep.subr.mxu0 0.0
          %1396 = vmatpush1.xpose.msra.mxu0 0.0
          %1397 = vmatprep.subr.mxu0 0.0
          %1398 = vmatpush1.xpose.msra.mxu0 0.0
          %1399 = vmatprep.subr.mxu0 0.0
          %1400 = vmatpush1.xpose.msra.mxu0 0.0
          %1401 = vmatprep.subr.mxu0 0.0
          %1402 = vmatpush1.xpose.msra.mxu0 0.0
          %1403 = vmatprep.subr.mxu0 0.0
          %1404 = vmatpush1.xpose.msra.mxu0 0.0
          %1405 = vmatprep.subr.mxu0 0.0
          %1406 = vmatpush1.xpose.msra.mxu0 0.0
          %1407 = vmatprep.subr.mxu0 0.0
          %1408 = vmatpush1.xpose.msra.mxu0 0.0
          %1409 = vmatprep.subr.mxu0 0.0
          %1410 = vmatpush1.xpose.msra.mxu0 0.0
          %1411 = vmatprep.subr.mxu0 0.0
          %1412 = vmatpush1.xpose.msra.mxu0 0.0
          %1413 = vmatprep.subr.mxu0 0.0
          %1414 = vmatpush1.xpose.msra.mxu0 0.0
          %1415 = vmatprep.subr.mxu0 0.0
          %1416 = vmatpush1.xpose.msra.mxu0 0.0
          %1417 = vmatprep.subr.mxu0 0.0
          %1418 = vmatpush1.xpose.msra.mxu0 0.0
          %1419 = vmatprep.subr.mxu0 0.0
          %1420 = vmatpush1.xpose.msra.mxu0 0.0
          %1421 = vmatprep.subr.mxu0 0.0
          %1422 = vmatpush1.xpose.msra.mxu0 0.0
          %1423 = vmatprep.subr.mxu0 0.0
          %1424 = vmatpush1.xpose.msra.mxu0 0.0
          %1425 = vmatprep.subr.mxu0 0.0
          %1426 = vmatpush1.xpose.msra.mxu0 0.0
          %1427 = vmatprep.subr.mxu0 0.0
          %1428 = vmatpush1.xpose.msra.mxu0 0.0
          %1429 = vmatprep.subr.mxu0 0.0
          %1430 = vmatpush1.xpose.msra.mxu0 0.0
          %1431 = vmatprep.subr.mxu0 0.0
          %1432 = vmatpush1.xpose.msra.mxu0 0.0
          %1433 = vmatprep.subr.mxu0 0.0
          %1434 = vmatpush1.xpose.msra.mxu0 0.0
          %1435 = vmatprep.subr.mxu0 0.0
          %1436 = vmatpush1.xpose.msra.mxu0 0.0
          %1437 = vmatprep.subr.mxu0 0.0
          %1438 = vmatpush1.xpose.msra.mxu0 0.0
          %1439 = vmatprep.subr.mxu0 0.0
          %1440 = vmatpush1.xpose.msra.mxu0 0.0
          %1441 = vmatprep.subr.mxu0 0.0
          %1442 = vmatpush1.xpose.msra.mxu0 0.0
          %1443 = vmatprep.subr.mxu0 0.0
          %1444 = vmatpush1.xpose.msra.mxu0 0.0
          %1445 = vmatprep.mubr.f32.mxu0 0.0
          %1446 = vmatmul.mubr.f32.gmra.mrb[0].mxu0 %v1376
          %v1447 = vpop.f32.mrb[0].mxu0
          %v1448 = vadd.f32 %v1220, %v1447
          %v1449 = vpop.f32.mrb[0].mxu0
          %1450 = vdwg.mxu0
          %v1452 = vsel %vm1222, %v1143, 0
          %v1455 = vsel %vm1222, %v1147, 0
          %1457 = vmatprep.subr.mxu0 0.0
          %1458 = vmatpush1.xpose.msra.mxu0 %v1455
          %1459 = vmatprep.subr.mxu0 0.0
          %1460 = vmatpush1.xpose.msra.mxu0 0.0
          %1461 = vmatprep.subr.mxu0 0.0
          %1462 = vmatpush1.xpose.msra.mxu0 0.0
          %1463 = vmatprep.subr.mxu0 0.0
          %1464 = vmatpush1.xpose.msra.mxu0 0.0
          %1465 = vmatprep.subr.mxu0 0.0
          %1466 = vmatpush1.xpose.msra.mxu0 0.0
          %1467 = vmatprep.subr.mxu0 0.0
          %1468 = vmatpush1.xpose.msra.mxu0 0.0
          %1469 = vmatprep.subr.mxu0 0.0
          %1470 = vmatpush1.xpose.msra.mxu0 0.0
          %1471 = vmatprep.subr.mxu0 0.0
          %1472 = vmatpush1.xpose.msra.mxu0 0.0
          %1473 = vmatprep.subr.mxu0 0.0
          %1474 = vmatpush1.xpose.msra.mxu0 0.0
          %1475 = vmatprep.subr.mxu0 0.0
          %1476 = vmatpush1.xpose.msra.mxu0 0.0
          %1477 = vmatprep.subr.mxu0 0.0
          %1478 = vmatpush1.xpose.msra.mxu0 0.0
          %1479 = vmatprep.subr.mxu0 0.0
          %1480 = vmatpush1.xpose.msra.mxu0 0.0
          %1481 = vmatprep.subr.mxu0 0.0
          %1482 = vmatpush1.xpose.msra.mxu0 0.0
          %1483 = vmatprep.subr.mxu0 0.0
          %1484 = vmatpush1.xpose.msra.mxu0 0.0
          %1485 = vmatprep.subr.mxu0 0.0
          %1486 = vmatpush1.xpose.msra.mxu0 0.0
          %1487 = vmatprep.subr.mxu0 0.0
          %1488 = vmatpush1.xpose.msra.mxu0 0.0
          %1489 = vmatprep.subr.mxu0 0.0
          %1490 = vmatpush1.xpose.msra.mxu0 0.0
          %1491 = vmatprep.subr.mxu0 0.0
          %1492 = vmatpush1.xpose.msra.mxu0 0.0
          %1493 = vmatprep.subr.mxu0 0.0
          %1494 = vmatpush1.xpose.msra.mxu0 0.0
          %1495 = vmatprep.subr.mxu0 0.0
          %1496 = vmatpush1.xpose.msra.mxu0 0.0
          %1497 = vmatprep.subr.mxu0 0.0
          %1498 = vmatpush1.xpose.msra.mxu0 0.0
          %1499 = vmatprep.subr.mxu0 0.0
          %1500 = vmatpush1.xpose.msra.mxu0 0.0
          %1501 = vmatprep.subr.mxu0 0.0
          %1502 = vmatpush1.xpose.msra.mxu0 0.0
          %1503 = vmatprep.subr.mxu0 0.0
          %1504 = vmatpush1.xpose.msra.mxu0 0.0
          %1505 = vmatprep.subr.mxu0 0.0
          %1506 = vmatpush1.xpose.msra.mxu0 0.0
          %1507 = vmatprep.subr.mxu0 0.0
          %1508 = vmatpush1.xpose.msra.mxu0 0.0
          %1509 = vmatprep.subr.mxu0 0.0
          %1510 = vmatpush1.xpose.msra.mxu0 0.0
          %1511 = vmatprep.subr.mxu0 0.0
          %1512 = vmatpush1.xpose.msra.mxu0 0.0
          %1513 = vmatprep.subr.mxu0 0.0
          %1514 = vmatpush1.xpose.msra.mxu0 0.0
          %1515 = vmatprep.subr.mxu0 0.0
          %1516 = vmatpush1.xpose.msra.mxu0 0.0
          %1517 = vmatprep.subr.mxu0 0.0
          %1518 = vmatpush1.xpose.msra.mxu0 0.0
          %1519 = vmatprep.subr.mxu0 0.0
          %1520 = vmatpush1.xpose.msra.mxu0 0.0
          %1521 = vmatprep.mubr.f32.mxu0 0.0
          %1522 = vmatmul.mubr.f32.gmra.mrb[0].mxu0 %v1452
          %v1523 = vpop.f32.mrb[0].mxu0
          %v1524 = vadd.f32 %v1220, %v1523
          %v1525 = vpop.f32.mrb[0].mxu0
          %1526 = vdwg.mxu0
          %v1527 = vsel %vm1222, %v1296, -inf
          %1528 = vmax.xlane.f32.xlu0 %v1527
          %v1529 = vpop.xlane.xlu0 %1528
          %v1530 = vsel %vm1222, %v1372, -inf
          %1531 = vmax.xlane.f32.xlu0 %v1530
          %v1532 = vpop.xlane.xlu0 %1531
          %v1533 = vsel %vm1222, %v1448, -inf
          %1534 = vmax.xlane.f32.xlu0 %v1533
          %v1535 = vpop.xlane.xlu0 %1534
          %v1536 = vsel %vm1222, %v1524, -inf
          %1537 = vmax.xlane.f32.xlu0 %v1536
          %v1538 = vpop.xlane.xlu0 %1537
          %v1539 = vsub.f32 %v1296, %v1529
          %v1540 = vsub.f32 %v1372, %v1532
          %v1541 = vsub.f32 %v1448, %v1535
          %v1542 = vsub.f32 %v1524, %v1538
          %v1543 = vmul.f32 %v1539, 1.442695
          %v1544 = vpow.pop %v1543
          %v1545 = vmul.f32 %v1540, 1.442695
          %v1546 = vpow.pop %v1545
          %v1547 = vmul.f32 %v1541, 1.442695
          %v1548 = vpow.pop %v1547
          %v1549 = vmul.f32 %v1542, 1.442695
          %v1550 = vpow.pop %v1549
          %v1551 = vsel %vm1222, %v1544, 0.0
          %1552 = vadd.xlane.f32.xlu0 %v1551
          %v1553 = vpop.xlane.xlu0 %1552
          %v1554 = vsel %vm1222, %v1546, 0.0
          %1555 = vadd.xlane.f32.xlu0 %v1554
          %v1556 = vpop.xlane.xlu0 %1555
          %v1557 = vsel %vm1222, %v1548, 0.0
          %1558 = vadd.xlane.f32.xlu0 %v1557
          %v1559 = vpop.xlane.xlu0 %1558
          %v1560 = vsel %vm1222, %v1550, 0.0
          %1561 = vadd.xlane.f32.xlu0 %v1560
          %v1562 = vpop.xlane.xlu0 %1561
          %v1563 = vrcp.pop %v1553
          %v1564 = vrcp.pop %v1556
          %v1565 = vrcp.pop %v1559
          %v1566 = vrcp.pop %v1562
          %v1567 = vmul.f32 %v1544, %v1563
          %v1568 = vmul.f32 %v1546, %v1564
          %v1569 = vmul.f32 %v1548, %v1565
          %v1570 = vmul.f32 %v1550, %v1566
          %v1572 = vsel %vm1222, %v1567, 0
          %1574 = vmatprep.subr.mxu0 0.0
          %1575 = vmatpush1.msra.mxu0 %v1212
          %1576 = vmatprep.subr.mxu0 0.0
          %1577 = vmatpush1.msra.mxu0 0.0
          %1578 = vmatprep.subr.mxu0 0.0
          %1579 = vmatpush1.msra.mxu0 0.0
          %1580 = vmatprep.subr.mxu0 0.0
          %1581 = vmatpush1.msra.mxu0 0.0
          %1582 = vmatprep.subr.mxu0 0.0
          %1583 = vmatpush1.msra.mxu0 0.0
          %1584 = vmatprep.subr.mxu0 0.0
          %1585 = vmatpush1.msra.mxu0 0.0
          %1586 = vmatprep.subr.mxu0 0.0
          %1587 = vmatpush1.msra.mxu0 0.0
          %1588 = vmatprep.subr.mxu0 0.0
          %1589 = vmatpush1.msra.mxu0 0.0
          %1590 = vmatprep.subr.mxu0 0.0
          %1591 = vmatpush1.msra.mxu0 0.0
          %1592 = vmatprep.subr.mxu0 0.0
          %1593 = vmatpush1.msra.mxu0 0.0
          %1594 = vmatprep.subr.mxu0 0.0
          %1595 = vmatpush1.msra.mxu0 0.0
          %1596 = vmatprep.subr.mxu0 0.0
          %1597 = vmatpush1.msra.mxu0 0.0
          %1598 = vmatprep.subr.mxu0 0.0
          %1599 = vmatpush1.msra.mxu0 0.0
          %1600 = vmatprep.subr.mxu0 0.0
          %1601 = vmatpush1.msra.mxu0 0.0
          %1602 = vmatprep.subr.mxu0 0.0
          %1603 = vmatpush1.msra.mxu0 0.0
          %1604 = vmatprep.subr.mxu0 0.0
          %1605 = vmatpush1.msra.mxu0 0.0
          %1606 = vmatprep.subr.mxu0 0.0
          %1607 = vmatpush1.msra.mxu0 0.0
          %1608 = vmatprep.subr.mxu0 0.0
          %1609 = vmatpush1.msra.mxu0 0.0
          %1610 = vmatprep.subr.mxu0 0.0
          %1611 = vmatpush1.msra.mxu0 0.0
          %1612 = vmatprep.subr.mxu0 0.0
          %1613 = vmatpush1.msra.mxu0 0.0
          %1614 = vmatprep.subr.mxu0 0.0
          %1615 = vmatpush1.msra.mxu0 0.0
          %1616 = vmatprep.subr.mxu0 0.0
          %1617 = vmatpush1.msra.mxu0 0.0
          %1618 = vmatprep.subr.mxu0 0.0
          %1619 = vmatpush1.msra.mxu0 0.0
          %1620 = vmatprep.subr.mxu0 0.0
          %1621 = vmatpush1.msra.mxu0 0.0
          %1622 = vmatprep.subr.mxu0 0.0
          %1623 = vmatpush1.msra.mxu0 0.0
          %1624 = vmatprep.subr.mxu0 0.0
          %1625 = vmatpush1.msra.mxu0 0.0
          %1626 = vmatprep.subr.mxu0 0.0
          %1627 = vmatpush1.msra.mxu0 0.0
          %1628 = vmatprep.subr.mxu0 0.0
          %1629 = vmatpush1.msra.mxu0 0.0
          %1630 = vmatprep.subr.mxu0 0.0
          %1631 = vmatpush1.msra.mxu0 0.0
          %1632 = vmatprep.subr.mxu0 0.0
          %1633 = vmatpush1.msra.mxu0 0.0
          %1634 = vmatprep.subr.mxu0 0.0
          %1635 = vmatpush1.msra.mxu0 0.0
          %1636 = vmatprep.subr.mxu0 0.0
          %1637 = vmatpush1.msra.mxu0 0.0
          %1638 = vmatprep.mubr.f32.mxu0 0.0
          %1639 = vmatmul.mubr.f32.gmra.mrb[0].mxu0 %v1572
          %v1640 = vpop.f32.mrb[0].mxu0
          %v1641 = vadd.f32 0.0, %v1640
          %v1642 = vpop.f32.mrb[0].mxu0
          %1643 = vdwg.mxu0
          %v1645 = vsel %vm1222, %v1568, 0
          %1647 = vmatprep.subr.mxu0 0.0
          %1648 = vmatpush1.msra.mxu0 %v1213
          %1649 = vmatprep.subr.mxu0 0.0
          %1650 = vmatpush1.msra.mxu0 0.0
          %1651 = vmatprep.subr.mxu0 0.0
          %1652 = vmatpush1.msra.mxu0 0.0
          %1653 = vmatprep.subr.mxu0 0.0
          %1654 = vmatpush1.msra.mxu0 0.0
          %1655 = vmatprep.subr.mxu0 0.0
          %1656 = vmatpush1.msra.mxu0 0.0
          %1657 = vmatprep.subr.mxu0 0.0
          %1658 = vmatpush1.msra.mxu0 0.0
          %1659 = vmatprep.subr.mxu0 0.0
          %1660 = vmatpush1.msra.mxu0 0.0
          %1661 = vmatprep.subr.mxu0 0.0
          %1662 = vmatpush1.msra.mxu0 0.0
          %1663 = vmatprep.subr.mxu0 0.0
          %1664 = vmatpush1.msra.mxu0 0.0
          %1665 = vmatprep.subr.mxu0 0.0
          %1666 = vmatpush1.msra.mxu0 0.0
          %1667 = vmatprep.subr.mxu0 0.0
          %1668 = vmatpush1.msra.mxu0 0.0
          %1669 = vmatprep.subr.mxu0 0.0
          %1670 = vmatpush1.msra.mxu0 0.0
          %1671 = vmatprep.subr.mxu0 0.0
          %1672 = vmatpush1.msra.mxu0 0.0
          %1673 = vmatprep.subr.mxu0 0.0
          %1674 = vmatpush1.msra.mxu0 0.0
          %1675 = vmatprep.subr.mxu0 0.0
          %1676 = vmatpush1.msra.mxu0 0.0
          %1677 = vmatprep.subr.mxu0 0.0
          %1678 = vmatpush1.msra.mxu0 0.0
          %1679 = vmatprep.subr.mxu0 0.0
          %1680 = vmatpush1.msra.mxu0 0.0
          %1681 = vmatprep.subr.mxu0 0.0
          %1682 = vmatpush1.msra.mxu0 0.0
          %1683 = vmatprep.subr.mxu0 0.0
          %1684 = vmatpush1.msra.mxu0 0.0
          %1685 = vmatprep.subr.mxu0 0.0
          %1686 = vmatpush1.msra.mxu0 0.0
          %1687 = vmatprep.subr.mxu0 0.0
          %1688 = vmatpush1.msra.mxu0 0.0
          %1689 = vmatprep.subr.mxu0 0.0
          %1690 = vmatpush1.msra.mxu0 0.0
          %1691 = vmatprep.subr.mxu0 0.0
          %1692 = vmatpush1.msra.mxu0 0.0
          %1693 = vmatprep.subr.mxu0 0.0
          %1694 = vmatpush1.msra.mxu0 0.0
          %1695 = vmatprep.subr.mxu0 0.0
          %1696 = vmatpush1.msra.mxu0 0.0
          %1697 = vmatprep.subr.mxu0 0.0
          %1698 = vmatpush1.msra.mxu0 0.0
          %1699 = vmatprep.subr.mxu0 0.0
          %1700 = vmatpush1.msra.mxu0 0.0
          %1701 = vmatprep.subr.mxu0 0.0
          %1702 = vmatpush1.msra.mxu0 0.0
          %1703 = vmatprep.subr.mxu0 0.0
          %1704 = vmatpush1.msra.mxu0 0.0
          %1705 = vmatprep.subr.mxu0 0.0
          %1706 = vmatpush1.msra.mxu0 0.0
          %1707 = vmatprep.subr.mxu0 0.0
          %1708 = vmatpush1.msra.mxu0 0.0
          %1709 = vmatprep.subr.mxu0 0.0
          %1710 = vmatpush1.msra.mxu0 0.0
          %1711 = vmatprep.mubr.f32.mxu0 0.0
          %1712 = vmatmul.mubr.f32.gmra.mrb[0].mxu0 %v1645
          %v1713 = vpop.f32.mrb[0].mxu0
          %v1714 = vadd.f32 0.0, %v1713
          %v1715 = vpop.f32.mrb[0].mxu0
          %1716 = vdwg.mxu0
          %v1718 = vsel %vm1222, %v1569, 0
          %1720 = vmatprep.subr.mxu0 0.0
          %1721 = vmatpush1.msra.mxu0 %v1214
          %1722 = vmatprep.subr.mxu0 0.0
          %1723 = vmatpush1.msra.mxu0 0.0
          %1724 = vmatprep.subr.mxu0 0.0
          %1725 = vmatpush1.msra.mxu0 0.0
          %1726 = vmatprep.subr.mxu0 0.0
          %1727 = vmatpush1.msra.mxu0 0.0
          %1728 = vmatprep.subr.mxu0 0.0
          %1729 = vmatpush1.msra.mxu0 0.0
          %1730 = vmatprep.subr.mxu0 0.0
          %1731 = vmatpush1.msra.mxu0 0.0
          %1732 = vmatprep.subr.mxu0 0.0
          %1733 = vmatpush1.msra.mxu0 0.0
          %1734 = vmatprep.subr.mxu0 0.0
          %1735 = vmatpush1.msra.mxu0 0.0
          %1736 = vmatprep.subr.mxu0 0.0
          %1737 = vmatpush1.msra.mxu0 0.0
          %1738 = vmatprep.subr.mxu0 0.0
          %1739 = vmatpush1.msra.mxu0 0.0
          %1740 = vmatprep.subr.mxu0 0.0
          %1741 = vmatpush1.msra.mxu0 0.0
          %1742 = vmatprep.subr.mxu0 0.0
          %1743 = vmatpush1.msra.mxu0 0.0
          %1744 = vmatprep.subr.mxu0 0.0
          %1745 = vmatpush1.msra.mxu0 0.0
          %1746 = vmatprep.subr.mxu0 0.0
          %1747 = vmatpush1.msra.mxu0 0.0
          %1748 = vmatprep.subr.mxu0 0.0
          %1749 = vmatpush1.msra.mxu0 0.0
          %1750 = vmatprep.subr.mxu0 0.0
          %1751 = vmatpush1.msra.mxu0 0.0
          %1752 = vmatprep.subr.mxu0 0.0
          %1753 = vmatpush1.msra.mxu0 0.0
          %1754 = vmatprep.subr.mxu0 0.0
          %1755 = vmatpush1.msra.mxu0 0.0
          %1756 = vmatprep.subr.mxu0 0.0
          %1757 = vmatpush1.msra.mxu0 0.0
          %1758 = vmatprep.subr.mxu0 0.0
          %1759 = vmatpush1.msra.mxu0 0.0
          %1760 = vmatprep.subr.mxu0 0.0
          %1761 = vmatpush1.msra.mxu0 0.0
          %1762 = vmatprep.subr.mxu0 0.0
          %1763 = vmatpush1.msra.mxu0 0.0
          %1764 = vmatprep.subr.mxu0 0.0
          %1765 = vmatpush1.msra.mxu0 0.0
          %1766 = vmatprep.subr.mxu0 0.0
          %1767 = vmatpush1.msra.mxu0 0.0
          %1768 = vmatprep.subr.mxu0 0.0
          %1769 = vmatpush1.msra.mxu0 0.0
          %1770 = vmatprep.subr.mxu0 0.0
          %1771 = vmatpush1.msra.mxu0 0.0
          %1772 = vmatprep.subr.mxu0 0.0
          %1773 = vmatpush1.msra.mxu0 0.0
          %1774 = vmatprep.subr.mxu0 0.0
          %1775 = vmatpush1.msra.mxu0 0.0
          %1776 = vmatprep.subr.mxu0 0.0
          %1777 = vmatpush1.msra.mxu0 0.0
          %1778 = vmatprep.subr.mxu0 0.0
          %1779 = vmatpush1.msra.mxu0 0.0
          %1780 = vmatprep.subr.mxu0 0.0
          %1781 = vmatpush1.msra.mxu0 0.0
          %1782 = vmatprep.subr.mxu0 0.0
          %1783 = vmatpush1.msra.mxu0 0.0
          %1784 = vmatprep.mubr.f32.mxu0 0.0
          %1785 = vmatmul.mubr.f32.gmra.mrb[0].mxu0 %v1718
          %v1786 = vpop.f32.mrb[0].mxu0
          %v1787 = vadd.f32 0.0, %v1786
          %v1788 = vpop.f32.mrb[0].mxu0
          %1789 = vdwg.mxu0
          %v1791 = vsel %vm1222, %v1570, 0
          %1793 = vmatprep.subr.mxu0 0.0
          %1794 = vmatpush1.msra.mxu0 %v1215
          %1795 = vmatprep.subr.mxu0 0.0
          %1796 = vmatpush1.msra.mxu0 0.0
          %1797 = vmatprep.subr.mxu0 0.0
          %1798 = vmatpush1.msra.mxu0 0.0
          %1799 = vmatprep.subr.mxu0 0.0
          %1800 = vmatpush1.msra.mxu0 0.0
          %1801 = vmatprep.subr.mxu0 0.0
          %1802 = vmatpush1.msra.mxu0 0.0
          %1803 = vmatprep.subr.mxu0 0.0
          %1804 = vmatpush1.msra.mxu0 0.0
          %1805 = vmatprep.subr.mxu0 0.0
          %1806 = vmatpush1.msra.mxu0 0.0
          %1807 = vmatprep.subr.mxu0 0.0
          %1808 = vmatpush1.msra.mxu0 0.0
          %1809 = vmatprep.subr.mxu0 0.0
          %1810 = vmatpush1.msra.mxu0 0.0
          %1811 = vmatprep.subr.mxu0 0.0
          %1812 = vmatpush1.msra.mxu0 0.0
          %1813 = vmatprep.subr.mxu0 0.0
          %1814 = vmatpush1.msra.mxu0 0.0
          %1815 = vmatprep.subr.mxu0 0.0
          %1816 = vmatpush1.msra.mxu0 0.0
          %1817 = vmatprep.subr.mxu0 0.0
          %1818 = vmatpush1.msra.mxu0 0.0
          %1819 = vmatprep.subr.mxu0 0.0
          %1820 = vmatpush1.msra.mxu0 0.0
          %1821 = vmatprep.subr.mxu0 0.0
          %1822 = vmatpush1.msra.mxu0 0.0
          %1823 = vmatprep.subr.mxu0 0.0
          %1824 = vmatpush1.msra.mxu0 0.0
          %1825 = vmatprep.subr.mxu0 0.0
          %1826 = vmatpush1.msra.mxu0 0.0
          %1827 = vmatprep.subr.mxu0 0.0
          %1828 = vmatpush1.msra.mxu0 0.0
          %1829 = vmatprep.subr.mxu0 0.0
          %1830 = vmatpush1.msra.mxu0 0.0
          %1831 = vmatprep.subr.mxu0 0.0
          %1832 = vmatpush1.msra.mxu0 0.0
          %1833 = vmatprep.subr.mxu0 0.0
          %1834 = vmatpush1.msra.mxu0 0.0
          %1835 = vmatprep.subr.mxu0 0.0
          %1836 = vmatpush1.msra.mxu0 0.0
          %1837 = vmatprep.subr.mxu0 0.0
          %1838 = vmatpush1.msra.mxu0 0.0
          %1839 = vmatprep.subr.mxu0 0.0
          %1840 = vmatpush1.msra.mxu0 0.0
          %1841 = vmatprep.subr.mxu0 0.0
          %1842 = vmatpush1.msra.mxu0 0.0
          %1843 = vmatprep.subr.mxu0 0.0
          %1844 = vmatpush1.msra.mxu0 0.0
          %1845 = vmatprep.subr.mxu0 0.0
          %1846 = vmatpush1.msra.mxu0 0.0
          %1847 = vmatprep.subr.mxu0 0.0
          %1848 = vmatpush1.msra.mxu0 0.0
          %1849 = vmatprep.subr.mxu0 0.0
          %1850 = vmatpush1.msra.mxu0 0.0
          %1851 = vmatprep.subr.mxu0 0.0
          %1852 = vmatpush1.msra.mxu0 0.0
          %1853 = vmatprep.subr.mxu0 0.0
          %1854 = vmatpush1.msra.mxu0 0.0
          %1855 = vmatprep.subr.mxu0 0.0
          %1856 = vmatpush1.msra.mxu0 0.0
          %1857 = vmatprep.mubr.f32.mxu0 0.0
          %1858 = vmatmul.mubr.f32.gmra.mrb[0].mxu0 %v1791
          %v1859 = vpop.f32.mrb[0].mxu0
          %v1860 = vadd.f32 0.0, %v1859
          %v1861 = vpop.f32.mrb[0].mxu0
          %1862 = vdwg.mxu0
          %v1863 = vcombine.low %v1641, %v1787
          %v1864 = vcombine.high %v1641, %v1787
          %v1866 = vunpack.c.l.s4 1983009808
          %v1867 = vunpack.c.0.s8 %v1866
          %v1868 = vlaneseq
          %v1869 = vshrl.u32 %v1868, 7
          %v1870 = vsub.s32 %v1867, %v1869
          %v1871 = vrot.slane %v1863, %v1870
          %v1873 = vunpack.c.l.s4 1983009808
          %v1874 = vunpack.c.0.s8 %v1873
          %v1875 = vlaneseq
          %v1876 = vshrl.u32 %v1875, 7
          %v1877 = vsub.s32 %v1874, %v1876
          %v1878 = vrot.slane %v1864, %v1877
          %v1879 = vcombine.low %v1714, %v1860
          %v1880 = vcombine.high %v1714, %v1860
          %v1882 = vunpack.c.l.s4 1983009808
          %v1883 = vunpack.c.0.s8 %v1882
          %v1884 = vlaneseq
          %v1885 = vshrl.u32 %v1884, 7
          %v1886 = vsub.s32 %v1883, %v1885
          %v1887 = vrot.slane %v1879, %v1886
          %v1889 = vunpack.c.l.s4 1983009808
          %v1890 = vunpack.c.0.s8 %v1889
          %v1891 = vlaneseq
          %v1892 = vshrl.u32 %v1891, 7
          %v1893 = vsub.s32 %v1890, %v1892
          %v1894 = vrot.slane %v1880, %v1893
          %v1895 = vcombine.low %v1871, %v1887
          %v1896 = vcombine.high %v1871, %v1887
          %v1898 = vunpack.c.l.s4 1934713408
          %v1899 = vunpack.c.0.s8 %v1898
          %v1900 = vlaneseq
          %v1901 = vshrl.u32 %v1900, 7
          %v1902 = vsub.s32 %v1899, %v1901
          %v1903 = vrot.slane %v1895, %v1902
          %v1905 = vunpack.c.l.s4 1934713408
          %v1906 = vunpack.c.0.s8 %v1905
          %v1907 = vlaneseq
          %v1908 = vshrl.u32 %v1907, 7
          %v1909 = vsub.s32 %v1906, %v1908
          %v1910 = vrot.slane %v1896, %v1909
          %v1911 = vcombine.low %v1878, %v1894
          %v1912 = vcombine.high %v1878, %v1894
          %v1914 = vunpack.c.l.s4 1934713408
          %v1915 = vunpack.c.0.s8 %v1914
          %v1916 = vlaneseq
          %v1917 = vshrl.u32 %v1916, 7
          %v1918 = vsub.s32 %v1915, %v1917
          %v1919 = vrot.slane %v1911, %v1918
          %v1921 = vunpack.c.l.s4 1934713408
          %v1922 = vunpack.c.0.s8 %v1921
          %v1923 = vlaneseq
          %v1924 = vshrl.u32 %v1923, 7
          %v1925 = vsub.s32 %v1922, %v1924
          %v1926 = vrot.slane %v1912, %v1925
          %v1927 = vcombine.high %v1903, 0.0
          %v1928 = vcombine.high %v1910, 0.0
          %v1929 = vcombine.high %v1919, 0.0
          %v1930 = vcombine.high %v1926, 0.0
          %v1931 = vcombine.low %v1903, %v1910
          %v1933 = vunpack.c.l.s4 1983009808
          %v1934 = vunpack.c.0.s8 %v1933
          %v1935 = vlaneseq
          %v1936 = vshrl.u32 %v1935, 7
          %v1937 = vsub.s32 %v1934, %v1936
          %v1938 = vrot.slane %v1931, %v1937
          %v1939 = vcombine.low %v1927, %v1928
          %v1941 = vunpack.c.l.s4 1983009808
          %v1942 = vunpack.c.0.s8 %v1941
          %v1943 = vlaneseq
          %v1944 = vshrl.u32 %v1943, 7
          %v1945 = vsub.s32 %v1942, %v1944
          %v1946 = vrot.slane %v1939, %v1945
          %v1947 = vcombine.low %v1919, %v1926
          %v1949 = vunpack.c.l.s4 1983009808
          %v1950 = vunpack.c.0.s8 %v1949
          %v1951 = vlaneseq
          %v1952 = vshrl.u32 %v1951, 7
          %v1953 = vsub.s32 %v1950, %v1952
          %v1954 = vrot.slane %v1947, %v1953
          %v1955 = vcombine.low %v1929, %v1930
          %v1957 = vunpack.c.l.s4 1983009808
          %v1958 = vunpack.c.0.s8 %v1957
          %v1959 = vlaneseq
          %v1960 = vshrl.u32 %v1959, 7
          %v1961 = vsub.s32 %v1958, %v1960
          %v1962 = vrot.slane %v1955, %v1961
          %v1963 = vcombine.low %v1938, %v1946
          %v1964 = vcombine.high %v1938, %v1946
          %v1966 = vunpack.c.l.s4 1934713408
          %v1967 = vunpack.c.0.s8 %v1966
          %v1968 = vlaneseq
          %v1969 = vshrl.u32 %v1968, 7
          %v1970 = vsub.s32 %v1967, %v1969
          %v1971 = vrot.slane %v1963, %v1970
          %v1973 = vunpack.c.l.s4 1934713408
          %v1974 = vunpack.c.0.s8 %v1973
          %v1975 = vlaneseq
          %v1976 = vshrl.u32 %v1975, 7
          %v1977 = vsub.s32 %v1974, %v1976
          %v1978 = vrot.slane %v1964, %v1977
          %v1979 = vcombine.low %v1954, %v1962
          %v1980 = vcombine.high %v1954, %v1962
          %v1982 = vunpack.c.l.s4 1934713408
          %v1983 = vunpack.c.0.s8 %v1982
          %v1984 = vlaneseq
          %v1985 = vshrl.u32 %v1984, 7
          %v1986 = vsub.s32 %v1983, %v1985
          %v1987 = vrot.slane %v1979, %v1986
          %v1989 = vunpack.c.l.s4 1934713408
          %v1990 = vunpack.c.0.s8 %v1989
          %v1991 = vlaneseq
          %v1992 = vshrl.u32 %v1991, 7
          %v1993 = vsub.s32 %v1990, %v1992
          %v1994 = vrot.slane %v1980, %v1993
          %v1995 = vcombine.low %v1971, %v1987
          %v1996 = vcombine.high %v1971, %v1987
          %v1997 = vcombine.low %v1978, %v1994
          %v1998 = vcombine.high %v1978, %v1994
          %2000 = vrot.lane.b32.xlu0 %v1996, 8
          %v2001 = vpop.permute.xlu0 %2000
          %2004 = vrot.lane.b32.xlu0 %v1997, 16
          %v2005 = vpop.permute.xlu0 %2004
          %2008 = vrot.lane.b32.xlu0 %v1998, 24
          %v2009 = vpop.permute.xlu0 %2008
          %v2011 = vsel %vm1222, %v1995, %v2001
          %vm2012 = vcmask 130048
          %v2013 = vsel %vm2012, %v2011, %v2005
          %vm2014 = vcmask 195584
          %v2015 = vsel %vm2014, %v2013, %v2009
          %s2016 = scalar_lea.vmem %s5, %s686
          %v2017 = vld [vmem:[%s2016] sm:$0xff]
          %v2018 = vld [vmem:[%s2016 + $0x8] sm:$0xff]
          %v2019 = vld [vmem:[%s2016 + $0x10] sm:$0xff]
          %v2020 = vld [vmem:[%s2016 + $0x18] sm:$0xff]
          %s2021 = scalar_lea.vmem [#allocation8], %s680
          %v2022 = vld [vmem:[%s2021] sm:$0x1]
          %v2024 = vlaneseq
          %v2025 = vshrl.u32 %v2024, 7
          %v2026 = vsub.s32 0, %v2025
          %v2027 = vrot.slane %v2022, %v2026
          %v2030 = vsel %vm700, %v2015, 0
          %2032 = vmatprep.subr.mxu0 0.0
          %2033 = vmatpush1.msra.mxu0 %v2017
          %2034 = vmatprep.subr.mxu0 0.0
          %2035 = vmatpush1.msra.mxu0 %v2018
          %2036 = vmatprep.subr.mxu0 0.0
          %2037 = vmatpush1.msra.mxu0 %v2019
          %2038 = vmatprep.subr.mxu0 0.0
          %2039 = vmatpush1.msra.mxu0 %v2020
          %2040 = vmatprep.subr.mxu0 0.0
          %2041 = vmatpush1.msra.mxu0 0.0
          %2042 = vmatprep.subr.mxu0 0.0
          %2043 = vmatpush1.msra.mxu0 0.0
          %2044 = vmatprep.subr.mxu0 0.0
          %2045 = vmatpush1.msra.mxu0 0.0
          %2046 = vmatprep.subr.mxu0 0.0
          %2047 = vmatpush1.msra.mxu0 0.0
          %2048 = vmatprep.subr.mxu0 0.0
          %2049 = vmatpush1.msra.mxu0 0.0
          %2050 = vmatprep.subr.mxu0 0.0
          %2051 = vmatpush1.msra.mxu0 0.0
          %2052 = vmatprep.subr.mxu0 0.0
          %2053 = vmatpush1.msra.mxu0 0.0
          %2054 = vmatprep.subr.mxu0 0.0
          %2055 = vmatpush1.msra.mxu0 0.0
          %2056 = vmatprep.subr.mxu0 0.0
          %2057 = vmatpush1.msra.mxu0 0.0
          %2058 = vmatprep.subr.mxu0 0.0
          %2059 = vmatpush1.msra.mxu0 0.0
          %2060 = vmatprep.subr.mxu0 0.0
          %2061 = vmatpush1.msra.mxu0 0.0
          %2062 = vmatprep.subr.mxu0 0.0
          %2063 = vmatpush1.msra.mxu0 0.0
          %2064 = vmatprep.subr.mxu0 0.0
          %2065 = vmatpush1.msra.mxu0 0.0
          %2066 = vmatprep.subr.mxu0 0.0
          %2067 = vmatpush1.msra.mxu0 0.0
          %2068 = vmatprep.subr.mxu0 0.0
          %2069 = vmatpush1.msra.mxu0 0.0
          %2070 = vmatprep.subr.mxu0 0.0
          %2071 = vmatpush1.msra.mxu0 0.0
          %2072 = vmatprep.subr.mxu0 0.0
          %2073 = vmatpush1.msra.mxu0 0.0
          %2074 = vmatprep.subr.mxu0 0.0
          %2075 = vmatpush1.msra.mxu0 0.0
          %2076 = vmatprep.subr.mxu0 0.0
          %2077 = vmatpush1.msra.mxu0 0.0
          %2078 = vmatprep.subr.mxu0 0.0
          %2079 = vmatpush1.msra.mxu0 0.0
          %2080 = vmatprep.subr.mxu0 0.0
          %2081 = vmatpush1.msra.mxu0 0.0
          %2082 = vmatprep.subr.mxu0 0.0
          %2083 = vmatpush1.msra.mxu0 0.0
          %2084 = vmatprep.subr.mxu0 0.0
          %2085 = vmatpush1.msra.mxu0 0.0
          %2086 = vmatprep.subr.mxu0 0.0
          %2087 = vmatpush1.msra.mxu0 0.0
          %2088 = vmatprep.subr.mxu0 0.0
          %2089 = vmatpush1.msra.mxu0 0.0
          %2090 = vmatprep.subr.mxu0 0.0
          %2091 = vmatpush1.msra.mxu0 0.0
          %2092 = vmatprep.subr.mxu0 0.0
          %2093 = vmatpush1.msra.mxu0 0.0
          %2094 = vmatprep.subr.mxu0 0.0
          %2095 = vmatpush1.msra.mxu0 0.0
          %2096 = vmatprep.mubr.f32.mxu0 0.0
          %2097 = vmatmul.mubr.f32.gmra.mrb[0].mxu0 %v2030
          %v2098 = vpop.f32.mrb[0].mxu0
          %v2099 = vadd.f32 %v2027, %v2098
          %v2100 = vpop.f32.mrb[0].mxu0
          %2101 = vdwg.mxu0
          %v2102 = vadd.f32 %v685, %v2099
          %s2103 = scalar_lea.vmem [#allocation10], %s680
          %v2104 = vld [vmem:[%s2103] sm:$0x1]
          %s2105 = scalar_lea.vmem [#allocation11], %s680
          %v2106 = vld [vmem:[%s2105] sm:$0x1]
          %v2107 = vsel %vm700, %v2102, 0.0
          %2108 = vadd.xlane.f32.xlu0 %v2107
          %v2109 = vpop.xlane.xlu0 %2108
          %v2110 = vrcp.pop 32.0
          %v2111 = vmul.f32 %v2109, %v2110
          %v2112 = vsub.f32 %v2102, %v2111
          %v2113 = vmul.f32 %v2112, %v2112
          %v2114 = vsel %vm700, %v2113, 0.0
          %2115 = vadd.xlane.f32.xlu0 %v2114
          %v2116 = vpop.xlane.xlu0 %2115
          %v2117 = vmul.f32 %v2116, %v2110
          %v2118 = vadd.f32 %v2117, 1e-05
          %v2119 = vrsqrt.pop %v2118
          %v2120 = vmul.f32 %v2112, %v2119
          %v2122 = vlaneseq
          %v2123 = vshrl.u32 %v2122, 7
          %v2124 = vsub.s32 0, %v2123
          %v2125 = vrot.slane %v2104, %v2124
          %v2127 = vmul.f32 %v2120, %v2125
          %v2129 = vlaneseq
          %v2130 = vshrl.u32 %v2129, 7
          %v2131 = vsub.s32 0, %v2130
          %v2132 = vrot.slane %v2106, %v2131
          %v2134 = vadd.f32 %v2127, %v2132
          %s2135 = scalar_lea.vmem %s9, %s686
          %v2136 = vld [vmem:[%s2135] sm:$0xff]
          %v2137 = vld [vmem:[%s2135 + $0x8] sm:$0xff]
          %v2138 = vld [vmem:[%s2135 + $0x10] sm:$0xff]
          %v2139 = vld [vmem:[%s2135 + $0x18] sm:$0xff]
          %s2140 = scalar_lea.vmem %s10, %s680
          %v2141 = vld [vmem:[%s2140] sm:$0x1]
          %v2143 = vlaneseq
          %v2144 = vshrl.u32 %v2143, 7
          %v2145 = vsub.s32 0, %v2144
          %v2146 = vrot.slane %v2141, %v2145
          %v2149 = vsel %vm700, %v2134, 0
          %2151 = vmatprep.subr.mxu0 0.0
          %2152 = vmatpush1.msra.mxu0 %v2136
          %2153 = vmatprep.subr.mxu0 0.0
          %2154 = vmatpush1.msra.mxu0 %v2137
          %2155 = vmatprep.subr.mxu0 0.0
          %2156 = vmatpush1.msra.mxu0 %v2138
          %2157 = vmatprep.subr.mxu0 0.0
          %2158 = vmatpush1.msra.mxu0 %v2139
          %2159 = vmatprep.subr.mxu0 0.0
          %2160 = vmatpush1.msra.mxu0 0.0
          %2161 = vmatprep.subr.mxu0 0.0
          %2162 = vmatpush1.msra.mxu0 0.0
          %2163 = vmatprep.subr.mxu0 0.0
          %2164 = vmatpush1.msra.mxu0 0.0
          %2165 = vmatprep.subr.mxu0 0.0
          %2166 = vmatpush1.msra.mxu0 0.0
          %2167 = vmatprep.subr.mxu0 0.0
          %2168 = vmatpush1.msra.mxu0 0.0
          %2169 = vmatprep.subr.mxu0 0.0
          %2170 = vmatpush1.msra.mxu0 0.0
          %2171 = vmatprep.subr.mxu0 0.0
          %2172 = vmatpush1.msra.mxu0 0.0
          %2173 = vmatprep.subr.mxu0 0.0
          %2174 = vmatpush1.msra.mxu0 0.0
          %2175 = vmatprep.subr.mxu0 0.0
          %2176 = vmatpush1.msra.mxu0 0.0
          %2177 = vmatprep.subr.mxu0 0.0
          %2178 = vmatpush1.msra.mxu0 0.0
          %2179 = vmatprep.subr.mxu0 0.0
          %2180 = vmatpush1.msra.mxu0 0.0
          %2181 = vmatprep.subr.mxu0 0.0
          %2182 = vmatpush1.msra.mxu0 0.0
          %2183 = vmatprep.subr.mxu0 0.0
          %2184 = vmatpush1.msra.mxu0 0.0
          %2185 = vmatprep.subr.mxu0 0.0
          %2186 = vmatpush1.msra.mxu0 0.0
          %2187 = vmatprep.subr.mxu0 0.0
          %2188 = vmatpush1.msra.mxu0 0.0
          %2189 = vmatprep.subr.mxu0 0.0
          %2190 = vmatpush1.msra.mxu0 0.0
          %2191 = vmatprep.subr.mxu0 0.0
          %2192 = vmatpush1.msra.mxu0 0.0
          %2193 = vmatprep.subr.mxu0 0.0
          %2194 = vmatpush1.msra.mxu0 0.0
          %2195 = vmatprep.subr.mxu0 0.0
          %2196 = vmatpush1.msra.mxu0 0.0
          %2197 = vmatprep.subr.mxu0 0.0
          %2198 = vmatpush1.msra.mxu0 0.0
          %2199 = vmatprep.subr.mxu0 0.0
          %2200 = vmatpush1.msra.mxu0 0.0
          %2201 = vmatprep.subr.mxu0 0.0
          %2202 = vmatpush1.msra.mxu0 0.0
          %2203 = vmatprep.subr.mxu0 0.0
          %2204 = vmatpush1.msra.mxu0 0.0
          %2205 = vmatprep.subr.mxu0 0.0
          %2206 = vmatpush1.msra.mxu0 0.0
          %2207 = vmatprep.subr.mxu0 0.0
          %2208 = vmatpush1.msra.mxu0 0.0
          %2209 = vmatprep.subr.mxu0 0.0
          %2210 = vmatpush1.msra.mxu0 0.0
          %2211 = vmatprep.subr.mxu0 0.0
          %2212 = vmatpush1.msra.mxu0 0.0
          %2213 = vmatprep.subr.mxu0 0.0
          %2214 = vmatpush1.msra.mxu0 0.0
          %2215 = vmatprep.mubr.f32.mxu0 0.0
          %2216 = vmatmul.mubr.f32.gmra.mrb[0].mxu0 %v2149
          %v2217 = vpop.f32.mrb[0].mxu0
          %v2218 = vadd.f32 %v2146, %v2217
          %v2219 = vpop.f32.mrb[0].mxu0
          %2220 = vdwg.mxu0
          %v2221 = vmax.f32 %v2218, 0.0
          %s2222 = smul.u32 %s680, 64
          %s2223 = scalar_lea.vmem %s11, %s2222
          %v2224 = vld [vmem:[%s2223] sm:$0xff]
          %v2225 = vld [vmem:[%s2223 + $0x8] sm:$0xff]
          %v2226 = vld [vmem:[%s2223 + $0x10] sm:$0xff]
          %v2227 = vld [vmem:[%s2223 + $0x18] sm:$0xff]
          %v2228 = vld [vmem:[%s2223 + $0x20] sm:$0xff]
          %v2229 = vld [vmem:[%s2223 + $0x28] sm:$0xff]
          %v2230 = vld [vmem:[%s2223 + $0x30] sm:$0xff]
          %v2231 = vld [vmem:[%s2223 + $0x38] sm:$0xff]
          %s2232 = scalar_lea.vmem %s12, %s680
          %v2233 = vld [vmem:[%s2232] sm:$0x1]
          %v2235 = vlaneseq
          %v2236 = vshrl.u32 %v2235, 7
          %v2237 = vsub.s32 0, %v2236
          %v2238 = vrot.slane %v2233, %v2237
          %vm2240 = vcmask 523264
          %v2242 = vsel %vm2240, %v2221, 0
          %2244 = vmatprep.subr.mxu0 0.0
          %2245 = vmatpush1.msra.mxu0 %v2224
          %2246 = vmatprep.subr.mxu0 0.0
          %2247 = vmatpush1.msra.mxu0 %v2225
          %2248 = vmatprep.subr.mxu0 0.0
          %2249 = vmatpush1.msra.mxu0 %v2226
          %2250 = vmatprep.subr.mxu0 0.0
          %2251 = vmatpush1.msra.mxu0 %v2227
          %2252 = vmatprep.subr.mxu0 0.0
          %2253 = vmatpush1.msra.mxu0 %v2228
          %2254 = vmatprep.subr.mxu0 0.0
          %2255 = vmatpush1.msra.mxu0 %v2229
          %2256 = vmatprep.subr.mxu0 0.0
          %2257 = vmatpush1.msra.mxu0 %v2230
          %2258 = vmatprep.subr.mxu0 0.0
          %2259 = vmatpush1.msra.mxu0 %v2231
          %2260 = vmatprep.subr.mxu0 0.0
          %2261 = vmatpush1.msra.mxu0 0.0
          %2262 = vmatprep.subr.mxu0 0.0
          %2263 = vmatpush1.msra.mxu0 0.0
          %2264 = vmatprep.subr.mxu0 0.0
          %2265 = vmatpush1.msra.mxu0 0.0
          %2266 = vmatprep.subr.mxu0 0.0
          %2267 = vmatpush1.msra.mxu0 0.0
          %2268 = vmatprep.subr.mxu0 0.0
          %2269 = vmatpush1.msra.mxu0 0.0
          %2270 = vmatprep.subr.mxu0 0.0
          %2271 = vmatpush1.msra.mxu0 0.0
          %2272 = vmatprep.subr.mxu0 0.0
          %2273 = vmatpush1.msra.mxu0 0.0
          %2274 = vmatprep.subr.mxu0 0.0
          %2275 = vmatpush1.msra.mxu0 0.0
          %2276 = vmatprep.subr.mxu0 0.0
          %2277 = vmatpush1.msra.mxu0 0.0
          %2278 = vmatprep.subr.mxu0 0.0
          %2279 = vmatpush1.msra.mxu0 0.0
          %2280 = vmatprep.subr.mxu0 0.0
          %2281 = vmatpush1.msra.mxu0 0.0
          %2282 = vmatprep.subr.mxu0 0.0
          %2283 = vmatpush1.msra.mxu0 0.0
          %2284 = vmatprep.subr.mxu0 0.0
          %2285 = vmatpush1.msra.mxu0 0.0
          %2286 = vmatprep.subr.mxu0 0.0
          %2287 = vmatpush1.msra.mxu0 0.0
          %2288 = vmatprep.subr.mxu0 0.0
          %2289 = vmatpush1.msra.mxu0 0.0
          %2290 = vmatprep.subr.mxu0 0.0
          %2291 = vmatpush1.msra.mxu0 0.0
          %2292 = vmatprep.subr.mxu0 0.0
          %2293 = vmatpush1.msra.mxu0 0.0
          %2294 = vmatprep.subr.mxu0 0.0
          %2295 = vmatpush1.msra.mxu0 0.0
          %2296 = vmatprep.subr.mxu0 0.0
          %2297 = vmatpush1.msra.mxu0 0.0
          %2298 = vmatprep.subr.mxu0 0.0
          %2299 = vmatpush1.msra.mxu0 0.0
          %2300 = vmatprep.subr.mxu0 0.0
          %2301 = vmatpush1.msra.mxu0 0.0
          %2302 = vmatprep.subr.mxu0 0.0
          %2303 = vmatpush1.msra.mxu0 0.0
          %2304 = vmatprep.subr.mxu0 0.0
          %2305 = vmatpush1.msra.mxu0 0.0
          %2306 = vmatprep.subr.mxu0 0.0
          %2307 = vmatpush1.msra.mxu0 0.0
          %2308 = vmatprep.mubr.f32.mxu0 0.0
          %2309 = vmatmul.mubr.f32.gmra.mrb[0].mxu0 %v2242
          %v2310 = vpop.f32.mrb[0].mxu0
          %v2311 = vadd.f32 %v2238, %v2310
          %v2312 = vpop.f32.mrb[0].mxu0
          %2313 = vdwg.mxu0
          %v2314 = vadd.f32 %v2134, %v2311
          %s2315 = scalar_lea.vmem %s13, %s680
          %v2316 = vld [vmem:[%s2315] sm:$0x1]
          %s2317 = scalar_lea.vmem %s14, %s680
          %v2318 = vld [vmem:[%s2317] sm:$0x1]
          %v2319 = vsel %vm700, %v2314, 0.0
          %2320 = vadd.xlane.f32.xlu0 %v2319
          %v2321 = vpop.xlane.xlu0 %2320
          %v2322 = vmul.f32 %v2321, %v2110
          %v2323 = vsub.f32 %v2314, %v2322
          %v2324 = vmul.f32 %v2323, %v2323
          %v2325 = vsel %vm700, %v2324, 0.0
          %2326 = vadd.xlane.f32.xlu0 %v2325
          %v2327 = vpop.xlane.xlu0 %2326
          %v2328 = vmul.f32 %v2327, %v2110
          %v2329 = vadd.f32 %v2328, 1e-05
          %v2330 = vrsqrt.pop %v2329
          %v2331 = vmul.f32 %v2323, %v2330
          %v2333 = vlaneseq
          %v2334 = vshrl.u32 %v2333, 7
          %v2335 = vsub.s32 0, %v2334
          %v2336 = vrot.slane %v2316, %v2335
          %v2338 = vmul.f32 %v2331, %v2336
          %v2340 = vlaneseq
          %v2341 = vshrl.u32 %v2340, 7
          %v2342 = vsub.s32 0, %v2341
          %v2343 = vrot.slane %v2318, %v2342
          %v2345 = vadd.f32 %v2338, %v2343
        $region117: #{tpu_custom_call.1} parent=87 // loop_footer
          %s684 = sadd.s32 1, %s680
        $region118: #{tpu_custom_call.1} parent=87 // loop_footer_branch
          %679 = sbr.rel target = $region114
        $region119: #{tpu_custom_call.1} parent=87 // loop_exit
          _
        %v2346 = vld [vmem:[%s15] sm:$0xff]
        %v2347 = vld [vmem:[%s15 + $0x8] sm:$0xff]
        %v2348 = vld [vmem:[%s15 + $0x10] sm:$0xff]
        %v2349 = vld [vmem:[%s15 + $0x18] sm:$0xff]
        %v2350 = vld [vmem:[%s16] sm:$0x1]
        %v2352 = vlaneseq
        %v2353 = vshrl.u32 %v2352, 7
        %v2354 = vsub.s32 0, %v2353
        %v2355 = vrot.slane %v2350, %v2354
        %vm2357 = vcmask 261120
        %v2359 = vsel %vm2357, %v685, 0
        %2361 = vmatprep.subr.mxu0 0.0
        %2362 = vmatpush1.msra.mxu0 %v2346
        %2363 = vmatprep.subr.mxu0 0.0
        %2364 = vmatpush1.msra.mxu0 %v2347
        %2365 = vmatprep.subr.mxu0 0.0
        %2366 = vmatpush1.msra.mxu0 %v2348
        %2367 = vmatprep.subr.mxu0 0.0
        %2368 = vmatpush1.msra.mxu0 %v2349
        %2369 = vmatprep.subr.mxu0 0.0
        %2370 = vmatpush1.msra.mxu0 0.0
        %2371 = vmatprep.subr.mxu0 0.0
        %2372 = vmatpush1.msra.mxu0 0.0
        %2373 = vmatprep.subr.mxu0 0.0
        %2374 = vmatpush1.msra.mxu0 0.0
        %2375 = vmatprep.subr.mxu0 0.0
        %2376 = vmatpush1.msra.mxu0 0.0
        %2377 = vmatprep.subr.mxu0 0.0
        %2378 = vmatpush1.msra.mxu0 0.0
        %2379 = vmatprep.subr.mxu0 0.0
        %2380 = vmatpush1.msra.mxu0 0.0
        %2381 = vmatprep.subr.mxu0 0.0
        %2382 = vmatpush1.msra.mxu0 0.0
        %2383 = vmatprep.subr.mxu0 0.0
        %2384 = vmatpush1.msra.mxu0 0.0
        %2385 = vmatprep.subr.mxu0 0.0
        %2386 = vmatpush1.msra.mxu0 0.0
        %2387 = vmatprep.subr.mxu0 0.0
        %2388 = vmatpush1.msra.mxu0 0.0
        %2389 = vmatprep.subr.mxu0 0.0
        %2390 = vmatpush1.msra.mxu0 0.0
        %2391 = vmatprep.subr.mxu0 0.0
        %2392 = vmatpush1.msra.mxu0 0.0
        %2393 = vmatprep.subr.mxu0 0.0
        %2394 = vmatpush1.msra.mxu0 0.0
        %2395 = vmatprep.subr.mxu0 0.0
        %2396 = vmatpush1.msra.mxu0 0.0
        %2397 = vmatprep.subr.mxu0 0.0
        %2398 = vmatpush1.msra.mxu0 0.0
        %2399 = vmatprep.subr.mxu0 0.0
        %2400 = vmatpush1.msra.mxu0 0.0
        %2401 = vmatprep.subr.mxu0 0.0
        %2402 = vmatpush1.msra.mxu0 0.0
        %2403 = vmatprep.subr.mxu0 0.0
        %2404 = vmatpush1.msra.mxu0 0.0
        %2405 = vmatprep.subr.mxu0 0.0
        %2406 = vmatpush1.msra.mxu0 0.0
        %2407 = vmatprep.subr.mxu0 0.0
        %2408 = vmatpush1.msra.mxu0 0.0
        %2409 = vmatprep.subr.mxu0 0.0
        %2410 = vmatpush1.msra.mxu0 0.0
        %2411 = vmatprep.subr.mxu0 0.0
        %2412 = vmatpush1.msra.mxu0 0.0
        %2413 = vmatprep.subr.mxu0 0.0
        %2414 = vmatpush1.msra.mxu0 0.0
        %2415 = vmatprep.subr.mxu0 0.0
        %2416 = vmatpush1.msra.mxu0 0.0
        %2417 = vmatprep.subr.mxu0 0.0
        %2418 = vmatpush1.msra.mxu0 0.0
        %2419 = vmatprep.subr.mxu0 0.0
        %2420 = vmatpush1.msra.mxu0 0.0
        %2421 = vmatprep.subr.mxu0 0.0
        %2422 = vmatpush1.msra.mxu0 0.0
        %2423 = vmatprep.subr.mxu0 0.0
        %2424 = vmatpush1.msra.mxu0 0.0
        %2425 = vmatprep.mubr.f32.mxu0 0.0
        %2426 = vmatmul.mubr.f32.gmra.mrb[0].mxu0 %v2359
        %v2427 = vpop.f32.mrb[0].mxu0
        %v2428 = vadd.f32 %v2355, %v2427
        %v2429 = vpop.f32.mrb[0].mxu0
        %2430 = vdwg.mxu0
        %2431 = vst [vmem:[%s669] sm:$0xff] %v2428
        %s2432 = sand.u32 %s419, 1
        %s2433 = scalar_lea.sflag [#allocation4], %s2432
        %s2434 = sand.u32 %s419, 1
        %s2435 = smul.addr %s2434, 8
        %s2436 = scalar_lea.vmem [#allocation13], %s2435
        // Predicated region
        $region120: #{tpu_custom_call.1} parent=87 // pred_check
          %p2437 = pneg %p429
        $region121: #{tpu_custom_call.1} parent=87 // pred_check_branch
          %2439 = sbr.rel (%p2437) target = $region123
        $region122: #{tpu_custom_call.1} parent=87 // pred_region
          %s2441 = ssub.s32 128, 128
          %2442 = vsyncadd %s2433, %s2441
          %s2443 = smul.addr %s39, 128
          %s2444 = scalar_lea.hbm %s17, %s2443
          %s2446 = sshll.u32 %s2436, 4
          %s2447 = int_to_ptr.vmem [resolvable:$true] %s2446
          %2449 = dma.vmem_to_hbm [thread:$0]  %s2447, 128, %s2444, %s2433
        $region123: #{tpu_custom_call.1} parent=87 // pred_fallthru
          _
      $region88: #{tpu_custom_call.1} parent=5 // pred_fallthru
        _
      %p2450 = scmp.le.s32.totalorder 2, %s34
      // Predicated region
      $region124: #{tpu_custom_call.1} parent=5 // pred_check
        %p2451 = pneg %p2450
      $region125: #{tpu_custom_call.1} parent=5 // pred_check_branch
        %2453 = sbr.rel (%p2451) target = $region127
      $region126: #{tpu_custom_call.1} parent=5 // pred_region
        %s2454 = ssub.s32 %s34, 2
        // Predicated region
        $region128: #{tpu_custom_call.1} parent=126 // pred_check
          %p2455 = pneg %p435
        $region129: #{tpu_custom_call.1} parent=126 // pred_check_branch
          %2457 = sbr.rel (%p2455) target = $region131
        $region130: #{tpu_custom_call.1} parent=126 // pred_region
          %s2458 = sand.u32 %s420, 1
          %s2459 = scalar_lea.sflag [#allocation4], %s2458
          %s2460 = sand.u32 %s420, 1
          %s2461 = smul.addr %s2460, 8
          %s2462 = scalar_lea.vmem [#allocation13], %s2461
          %2463 = dma.done %s2459, 128
        $region131: #{tpu_custom_call.1} parent=126 // pred_fallthru
          _
      $region127: #{tpu_custom_call.1} parent=5 // pred_fallthru
        _
    $region6: #{tpu_custom_call.1} parent=1 // loop_footer
      %s38 = sadd.s32 1, %s34
    $region7: #{tpu_custom_call.1} parent=1 // loop_footer_branch
      %33 = sbr.rel target = $region3
    $region8: #{tpu_custom_call.1} parent=1 // loop_exit
      _
    %2464 = vsyncpa [#allocation3], 1
    %s2465 = scalar_lea.sflag [#allocation3], 1
    %2466 = vsyncpa %s2465, 1
    %2467 = vsyncpa [#allocation6], 1
    %s2468 = scalar_lea.sflag [#allocation6], 1
    %2469 = vsyncpa %s2468, 1
    %2470 = vsyncpa [#allocation9], 1
    %2471 = vsyncpa [#allocation12], 1
    %2472 = vsyncpa [#allocation4], 1
    %s2473 = scalar_lea.sflag [#allocation4], 1
    %2474 = vsyncpa %s2473, 1

</llo_original>
